<compile_context>
chip_gen: v7x
topology: tpu7x:2x2x1
jax: 0.10.0
libtpu: 0.0.40
codegen_flags: <defaults>
</compile_context>

<pallas_src>
import numpy as np
import jax
import jax.numpy as jnp
from jax.experimental import pallas as pl
from jax.experimental.pallas import tpu as pltpu

C_HID = 16          # hidden channels of conv1
KH = KW = 3         # 3x3 kernels
NTAPS = KH * KW     # 9


def simple_unet_forward(x_nchw, w1, b1, w2, b2):
    """x: (N,1,H,W) f32.  w1: (16,1,3,3), b1: (16,), w2: (1,16,3,3), b2: (1,)."""
    N, Cin, H, W = x_nchw.shape
    assert Cin == 1

    Hp, Wp = H + 2, W + 2                    # output + 1-px ring ("extended" plane)
    Ne = Hp * Wp                             # flattened extended plane
    NE_PAD = pl.cdiv(Ne, 128) * 128          # lane-aligned plane width
    G = pl.cdiv(Wp + 1, 128) * 128           # headroom >= largest tap offset (Wp+1)
    XROW = G + NE_PAD + G                    # padded input / hidden row-buffer width

    # 3x3 tap offsets in flattened extended coordinates (static Python ints).
    offsets = [(dy - 1) * Wp + (dx - 1) for dy in range(KH) for dx in range(KW)]

    # ---------------- wrapper: layout plumbing only (a single pad) --------------
    # conv1's zero padding, flattened per image into a lane-dense row with zero
    # headroom on both sides -> every conv tap is a static lane-offset slice.
    x_pad1 = jnp.pad(x_nchw[:, 0].astype(jnp.float32), ((0, 0), (1, 1), (1, 1)))
    x_row = jnp.pad(x_pad1.reshape(N, Ne), ((0, 0), (G, XROW - G - Ne)))
    x_row = x_row.reshape(N, 1, XROW)

    # mask that zeroes the hidden activation's 1-px ring (= conv2's zero padding)
    u = jnp.arange(Hp)[:, None]
    v = jnp.arange(Wp)[None, :]
    ring = ((u >= 1) & (u <= H) & (v >= 1) & (v <= W)).astype(jnp.float32)
    mask = jnp.pad(ring.reshape(1, Ne), ((0, 0), (0, NE_PAD - Ne)))   # (1, NE_PAD)

    w1_mat = w1.reshape(C_HID, NTAPS).astype(jnp.float32)   # [chan, tap]
    b1_col = b1.reshape(C_HID, 1).astype(jnp.float32)
    w2_mat = w2.reshape(C_HID, NTAPS).astype(jnp.float32)   # [chan, tap]
    b2_col = b2.reshape(1, 1).astype(jnp.float32)

    # --------------------------------- kernel -----------------------------------
    # NOTE: for much larger images (where a (16, NE_PAD) f32 tile no longer fits
    # the 64-vreg file), chunk the lane axis of the two FMA loops with
    # lax.fori_loop(..., unroll=True); unnecessary at these sizes.
    def kernel(x_ref, w1_ref, b1_ref, w2_ref, b2_ref, mask_ref, o_ref, hbuf_ref):
        w1m = w1_ref[...]                                    # (16, 9)
        w2m = w2_ref[...]                                    # (16, 9)

        # conv1 (1->16): 9 shifted-row broadcast-FMAs on the VPU, + bias, ReLU,
        # then zero the 1-px ring so conv2 sees exact zero padding.
        h = jnp.zeros((C_HID, NE_PAD), jnp.float32)
        for t, d in enumerate(offsets):
            h = h + w1m[:, t:t + 1] * x_ref[:, G + d:G + d + NE_PAD]
        h = jnp.maximum(h + b1_ref[...], 0.0) * mask_ref[...]

        # Stage hidden activations into a lane-dense row buffer with zero
        # headroom on both sides so each conv2 tap is a static lane-offset slice.
        # (Headroom is re-zeroed every step: with a "parallel" grid axis each
        #  TensorCore owns its own scratch, so a program_id==0 guard is unsafe.)
        hbuf_ref[:, 0:G] = jnp.zeros((C_HID, G), jnp.float32)
        hbuf_ref[:, G + NE_PAD:XROW] = jnp.zeros((C_HID, G), jnp.float32)
        hbuf_ref[:, G:G + NE_PAD] = h

        # conv2 (16->1): 9 shifted broadcast-FMAs over (16, NE_PAD), then one
        # cross-channel (sublane) reduction + bias.  No M=1 MXU matmuls.
        acc = jnp.zeros((C_HID, NE_PAD), jnp.float32)
        for t, d in enumerate(offsets):
            acc = acc + w2m[:, t:t + 1] * hbuf_ref[:, G + d:G + d + NE_PAD]
        o_ref[...] = jnp.sum(acc, axis=0, keepdims=True) + b2_ref[...]

    out_rows = pl.pallas_call(
        kernel,
        out_shape=jax.ShapeDtypeStruct((N, 1, NE_PAD), jnp.float32),
        grid=(N,),
        in_specs=[
            pl.BlockSpec((None, 1, XROW), lambda i: (i, 0, 0)),   # per-image input row
            pl.BlockSpec((C_HID, NTAPS), lambda i: (0, 0)),       # w1
            pl.BlockSpec((C_HID, 1), lambda i: (0, 0)),           # b1
            pl.BlockSpec((C_HID, NTAPS), lambda i: (0, 0)),       # w2
            pl.BlockSpec((1, 1), lambda i: (0, 0)),               # b2
            pl.BlockSpec((1, NE_PAD), lambda i: (0, 0)),          # ring mask
        ],
        out_specs=pl.BlockSpec((None, 1, NE_PAD), lambda i: (i, 0, 0)),
        scratch_shapes=[pltpu.VMEM((C_HID, XROW), jnp.float32)],
        compiler_params=pltpu.CompilerParams(
            dimension_semantics=("parallel",)),
    )(x_row, w1_mat, b1_col, w2_mat, b2_col, mask)

    # extract the valid H x W interior and restore NCHW
    out = out_rows[:, 0, :Ne].reshape(N, Hp, Wp)[:, 1:H + 1, 1:W + 1]
    return out[:, None, :, :]


def reference_forward(x_nchw, w1, b1, w2, b2):
    """Pure-JAX reference (lax conv), NCHW."""
    dn = jax.lax.conv_dimension_numbers(x_nchw.shape, w1.shape,
                                        ("NCHW", "OIHW", "NCHW"))
    h = jax.lax.conv_general_dilated(x_nchw, w1, (1, 1), "SAME",
                                     dimension_numbers=dn)
    h = jax.nn.relu(h + b1[None, :, None, None])
    dn2 = jax.lax.conv_dimension_numbers(h.shape, w2.shape,
                                         ("NCHW", "OIHW", "NCHW"))
    o = jax.lax.conv_general_dilated(h, w2, (1, 1), "SAME",
                                     dimension_numbers=dn2)
    return o + b2[None, :, None, None]


if __name__ == "__main__":
    key = jax.random.PRNGKey(0)
    k_x, k_w1, k_b1, k_w2, k_b2 = jax.random.split(key, 5)

    N, H, W = 2, 16, 16
    x = jax.random.normal(k_x, (N, 1, H, W), dtype=jnp.float32)

    # deterministic synthetic parameters (shapes from the nn.Conv2d defs)
    w1 = 0.1 * jax.random.normal(k_w1, (C_HID, 1, KH, KW), dtype=jnp.float32)
    b1 = 0.1 * jax.random.normal(k_b1, (C_HID,), dtype=jnp.float32)
    w2 = 0.1 * jax.random.normal(k_w2, (1, C_HID, KH, KW), dtype=jnp.float32)
    b2 = 0.1 * jax.random.normal(k_b2, (1,), dtype=jnp.float32)

    y = jax.block_until_ready(simple_unet_forward(x, w1, b1, w2, b2))
    y_ref = jax.block_until_ready(reference_forward(x, w1, b1, w2, b2))
    np.testing.assert_allclose(np.asarray(y), np.asarray(y_ref),
                               rtol=1e-4, atol=1e-4)

    print("KERNEL_OK")
</pallas_src>

<mosaic_0001>
module attributes {stable_mosaic.version = 11 : i64} {
  func.func @kernel(%arg0: i32, %arg1: memref<1x1x640xf32, #tpu.memory_space<vmem>>, %arg2: memref<16x9xf32, #tpu.memory_space<vmem>>, %arg3: memref<16x1xf32, #tpu.memory_space<vmem>>, %arg4: memref<16x9xf32, #tpu.memory_space<vmem>>, %arg5: memref<1x1xf32, #tpu.memory_space<vmem>>, %arg6: memref<1x384xf32, #tpu.memory_space<vmem>>, %arg7: memref<1x1x384xf32, #tpu.memory_space<vmem>>, %arg8: memref<16x640xf32, #tpu.memory_space<vmem>>) attributes {dimension_semantics = [#tpu.dimension_semantics<parallel>], iteration_bounds = array<i64: 2>, scalar_prefetch = 0 : i64, scratch_operands = 1 : i64, tpu.core_type = #tpu.core_type<tc>, window_params = [{transform_indices = @transform_0, window_bounds = array<i64: 1, 1, 640>}, {pipeline_mode = #tpu.pipeline_mode<synchronous>, transform_indices = @transform_1, window_bounds = array<i64: 16, 9>}, {pipeline_mode = #tpu.pipeline_mode<synchronous>, transform_indices = @transform_2, window_bounds = array<i64: 16, 1>}, {pipeline_mode = #tpu.pipeline_mode<synchronous>, transform_indices = @transform_3, window_bounds = array<i64: 16, 9>}, {pipeline_mode = #tpu.pipeline_mode<synchronous>, transform_indices = @transform_4, window_bounds = array<i64: 1, 1>}, {pipeline_mode = #tpu.pipeline_mode<synchronous>, transform_indices = @transform_5, window_bounds = array<i64: 1, 384>}, {transform_indices = @transform_6, window_bounds = array<i64: 1, 1, 384>}]} {
    %c0 = arith.constant 0 : index
    %c0_0 = arith.constant 0 : index
    %0 = vector.load %arg2[%c0, %c0_0] : memref<16x9xf32, #tpu.memory_space<vmem>>, vector<16x9xf32>
    %c0_1 = arith.constant 0 : index
    %c0_2 = arith.constant 0 : index
    %1 = vector.load %arg4[%c0_1, %c0_2] : memref<16x9xf32, #tpu.memory_space<vmem>>, vector<16x9xf32>
    %cst = arith.constant 0.000000e+00 : f32
    %2 = vector.broadcast %cst : f32 to vector<16x384xf32>
    %3 = vector.extract_strided_slice %0 {offsets = [0, 0], sizes = [16, 1], strides = [1, 1]} : vector<16x9xf32> to vector<16x1xf32>
    %c0_3 = arith.constant 0 : index
    %c0_4 = arith.constant 0 : index
    %c109 = arith.constant 109 : index
    %4 = vector.load %arg1[%c0_3, %c0_4, %c109] : memref<1x1x640xf32, #tpu.memory_space<vmem>>, vector<1x1x384xf32>
    %5 = vector.shape_cast %4 : vector<1x1x384xf32> to vector<1x384xf32>
    %6 = vector.broadcast %3 : vector<16x1xf32> to vector<16x384xf32>
    %7 = vector.broadcast %5 : vector<1x384xf32> to vector<16x384xf32>
    %8 = arith.mulf %6, %7 : vector<16x384xf32>
    %9 = arith.addf %2, %8 : vector<16x384xf32>
    %10 = vector.extract_strided_slice %0 {offsets = [0, 1], sizes = [16, 1], strides = [1, 1]} : vector<16x9xf32> to vector<16x1xf32>
    %c0_5 = arith.constant 0 : index
    %c0_6 = arith.constant 0 : index
    %c110 = arith.constant 110 : index
    %11 = vector.load %arg1[%c0_5, %c0_6, %c110] : memref<1x1x640xf32, #tpu.memory_space<vmem>>, vector<1x1x384xf32>
    %12 = vector.shape_cast %11 : vector<1x1x384xf32> to vector<1x384xf32>
    %13 = vector.broadcast %10 : vector<16x1xf32> to vector<16x384xf32>
    %14 = vector.broadcast %12 : vector<1x384xf32> to vector<16x384xf32>
    %15 = arith.mulf %13, %14 : vector<16x384xf32>
    %16 = arith.addf %9, %15 : vector<16x384xf32>
    %17 = vector.extract_strided_slice %0 {offsets = [0, 2], sizes = [16, 1], strides = [1, 1]} : vector<16x9xf32> to vector<16x1xf32>
    %c0_7 = arith.constant 0 : index
    %c0_8 = arith.constant 0 : index
    %c111 = arith.constant 111 : index
    %18 = vector.load %arg1[%c0_7, %c0_8, %c111] : memref<1x1x640xf32, #tpu.memory_space<vmem>>, vector<1x1x384xf32>
    %19 = vector.shape_cast %18 : vector<1x1x384xf32> to vector<1x384xf32>
    %20 = vector.broadcast %17 : vector<16x1xf32> to vector<16x384xf32>
    %21 = vector.broadcast %19 : vector<1x384xf32> to vector<16x384xf32>
    %22 = arith.mulf %20, %21 : vector<16x384xf32>
    %23 = arith.addf %16, %22 : vector<16x384xf32>
    %24 = vector.extract_strided_slice %0 {offsets = [0, 3], sizes = [16, 1], strides = [1, 1]} : vector<16x9xf32> to vector<16x1xf32>
    %c0_9 = arith.constant 0 : index
    %c0_10 = arith.constant 0 : index
    %c127 = arith.constant 127 : index
    %25 = vector.load %arg1[%c0_9, %c0_10, %c127] : memref<1x1x640xf32, #tpu.memory_space<vmem>>, vector<1x1x384xf32>
    %26 = vector.shape_cast %25 : vector<1x1x384xf32> to vector<1x384xf32>
    %27 = vector.broadcast %24 : vector<16x1xf32> to vector<16x384xf32>
    %28 = vector.broadcast %26 : vector<1x384xf32> to vector<16x384xf32>
    %29 = arith.mulf %27, %28 : vector<16x384xf32>
    %30 = arith.addf %23, %29 : vector<16x384xf32>
    %31 = vector.extract_strided_slice %0 {offsets = [0, 4], sizes = [16, 1], strides = [1, 1]} : vector<16x9xf32> to vector<16x1xf32>
    %c0_11 = arith.constant 0 : index
    %c0_12 = arith.constant 0 : index
    %c128 = arith.constant 128 : index
    %32 = vector.load %arg1[%c0_11, %c0_12, %c128] : memref<1x1x640xf32, #tpu.memory_space<vmem>>, vector<1x1x384xf32>
    %33 = vector.shape_cast %32 : vector<1x1x384xf32> to vector<1x384xf32>
    %34 = vector.broadcast %31 : vector<16x1xf32> to vector<16x384xf32>
    %35 = vector.broadcast %33 : vector<1x384xf32> to vector<16x384xf32>
    %36 = arith.mulf %34, %35 : vector<16x384xf32>
    %37 = arith.addf %30, %36 : vector<16x384xf32>
    %38 = vector.extract_strided_slice %0 {offsets = [0, 5], sizes = [16, 1], strides = [1, 1]} : vector<16x9xf32> to vector<16x1xf32>
    %c0_13 = arith.constant 0 : index
    %c0_14 = arith.constant 0 : index
    %c129 = arith.constant 129 : index
    %39 = vector.load %arg1[%c0_13, %c0_14, %c129] : memref<1x1x640xf32, #tpu.memory_space<vmem>>, vector<1x1x384xf32>
    %40 = vector.shape_cast %39 : vector<1x1x384xf32> to vector<1x384xf32>
    %41 = vector.broadcast %38 : vector<16x1xf32> to vector<16x384xf32>
    %42 = vector.broadcast %40 : vector<1x384xf32> to vector<16x384xf32>
    %43 = arith.mulf %41, %42 : vector<16x384xf32>
    %44 = arith.addf %37, %43 : vector<16x384xf32>
    %45 = vector.extract_strided_slice %0 {offsets = [0, 6], sizes = [16, 1], strides = [1, 1]} : vector<16x9xf32> to vector<16x1xf32>
    %c0_15 = arith.constant 0 : index
    %c0_16 = arith.constant 0 : index
    %c145 = arith.constant 145 : index
    %46 = vector.load %arg1[%c0_15, %c0_16, %c145] : memref<1x1x640xf32, #tpu.memory_space<vmem>>, vector<1x1x384xf32>
    %47 = vector.shape_cast %46 : vector<1x1x384xf32> to vector<1x384xf32>
    %48 = vector.broadcast %45 : vector<16x1xf32> to vector<16x384xf32>
    %49 = vector.broadcast %47 : vector<1x384xf32> to vector<16x384xf32>
    %50 = arith.mulf %48, %49 : vector<16x384xf32>
    %51 = arith.addf %44, %50 : vector<16x384xf32>
    %52 = vector.extract_strided_slice %0 {offsets = [0, 7], sizes = [16, 1], strides = [1, 1]} : vector<16x9xf32> to vector<16x1xf32>
    %c0_17 = arith.constant 0 : index
    %c0_18 = arith.constant 0 : index
    %c146 = arith.constant 146 : index
    %53 = vector.load %arg1[%c0_17, %c0_18, %c146] : memref<1x1x640xf32, #tpu.memory_space<vmem>>, vector<1x1x384xf32>
    %54 = vector.shape_cast %53 : vector<1x1x384xf32> to vector<1x384xf32>
    %55 = vector.broadcast %52 : vector<16x1xf32> to vector<16x384xf32>
    %56 = vector.broadcast %54 : vector<1x384xf32> to vector<16x384xf32>
    %57 = arith.mulf %55, %56 : vector<16x384xf32>
    %58 = arith.addf %51, %57 : vector<16x384xf32>
    %59 = vector.extract_strided_slice %0 {offsets = [0, 8], sizes = [16, 1], strides = [1, 1]} : vector<16x9xf32> to vector<16x1xf32>
    %c0_19 = arith.constant 0 : index
    %c0_20 = arith.constant 0 : index
    %c147 = arith.constant 147 : index
    %60 = vector.load %arg1[%c0_19, %c0_20, %c147] : memref<1x1x640xf32, #tpu.memory_space<vmem>>, vector<1x1x384xf32>
    %61 = vector.shape_cast %60 : vector<1x1x384xf32> to vector<1x384xf32>
    %62 = vector.broadcast %59 : vector<16x1xf32> to vector<16x384xf32>
    %63 = vector.broadcast %61 : vector<1x384xf32> to vector<16x384xf32>
    %64 = arith.mulf %62, %63 : vector<16x384xf32>
    %65 = arith.addf %58, %64 : vector<16x384xf32>
    %c0_21 = arith.constant 0 : index
    %c0_22 = arith.constant 0 : index
    %66 = vector.load %arg3[%c0_21, %c0_22] : memref<16x1xf32, #tpu.memory_space<vmem>>, vector<16x1xf32>
    %67 = vector.broadcast %66 : vector<16x1xf32> to vector<16x384xf32>
    %68 = arith.addf %65, %67 : vector<16x384xf32>
    %cst_23 = arith.constant 0.000000e+00 : f32
    %69 = vector.broadcast %cst_23 : f32 to vector<16x384xf32>
    %70 = arith.maximumf %68, %69 : vector<16x384xf32>
    %c0_24 = arith.constant 0 : index
    %c0_25 = arith.constant 0 : index
    %71 = vector.load %arg6[%c0_24, %c0_25] : memref<1x384xf32, #tpu.memory_space<vmem>>, vector<1x384xf32>
    %72 = vector.broadcast %71 : vector<1x384xf32> to vector<16x384xf32>
    %73 = arith.mulf %70, %72 : vector<16x384xf32>
    %cst_26 = arith.constant 0.000000e+00 : f32
    %74 = vector.broadcast %cst_26 : f32 to vector<16x128xf32>
    %c0_27 = arith.constant 0 : index
    %c0_28 = arith.constant 0 : index
    %75 = vector.load %arg8[%c0_27, %c0_28] : memref<16x640xf32, #tpu.memory_space<vmem>>, vector<16x128xf32>
    tpu.vector_store %arg8[%c0_27, %c0_28], %74 {strides = array<i32>} : memref<16x640xf32, #tpu.memory_space<vmem>>, vector<16x128xf32>,
    %cst_29 = arith.constant 0.000000e+00 : f32
    %76 = vector.broadcast %cst_29 : f32 to vector<16x128xf32>
    %c0_30 = arith.constant 0 : index
    %c512 = arith.constant 512 : index
    %77 = vector.load %arg8[%c0_30, %c512] : memref<16x640xf32, #tpu.memory_space<vmem>>, vector<16x128xf32>
    tpu.vector_store %arg8[%c0_30, %c512], %76 {strides = array<i32>} : memref<16x640xf32, #tpu.memory_space<vmem>>, vector<16x128xf32>,
    %c0_31 = arith.constant 0 : index
    %c128_32 = arith.constant 128 : index
    %78 = vector.load %arg8[%c0_31, %c128_32] : memref<16x640xf32, #tpu.memory_space<vmem>>, vector<16x384xf32>
    tpu.vector_store %arg8[%c0_31, %c128_32], %73 {strides = array<i32>} : memref<16x640xf32, #tpu.memory_space<vmem>>, vector<16x384xf32>,
    %cst_33 = arith.constant 0.000000e+00 : f32
    %79 = vector.broadcast %cst_33 : f32 to vector<16x384xf32>
    %80 = vector.extract_strided_slice %1 {offsets = [0, 0], sizes = [16, 1], strides = [1, 1]} : vector<16x9xf32> to vector<16x1xf32>
    %c0_34 = arith.constant 0 : index
    %c109_35 = arith.constant 109 : index
    %81 = vector.load %arg8[%c0_34, %c109_35] : memref<16x640xf32, #tpu.memory_space<vmem>>, vector<16x384xf32>
    %82 = vector.broadcast %80 : vector<16x1xf32> to vector<16x384xf32>
    %83 = arith.mulf %82, %81 : vector<16x384xf32>
    %84 = arith.addf %79, %83 : vector<16x384xf32>
    %85 = vector.extract_strided_slice %1 {offsets = [0, 1], sizes = [16, 1], strides = [1, 1]} : vector<16x9xf32> to vector<16x1xf32>
    %c0_36 = arith.constant 0 : index
    %c110_37 = arith.constant 110 : index
    %86 = vector.load %arg8[%c0_36, %c110_37] : memref<16x640xf32, #tpu.memory_space<vmem>>, vector<16x384xf32>
    %87 = vector.broadcast %85 : vector<16x1xf32> to vector<16x384xf32>
    %88 = arith.mulf %87, %86 : vector<16x384xf32>
    %89 = arith.addf %84, %88 : vector<16x384xf32>
    %90 = vector.extract_strided_slice %1 {offsets = [0, 2], sizes = [16, 1], strides = [1, 1]} : vector<16x9xf32> to vector<16x1xf32>
    %c0_38 = arith.constant 0 : index
    %c111_39 = arith.constant 111 : index
    %91 = vector.load %arg8[%c0_38, %c111_39] : memref<16x640xf32, #tpu.memory_space<vmem>>, vector<16x384xf32>
    %92 = vector.broadcast %90 : vector<16x1xf32> to vector<16x384xf32>
    %93 = arith.mulf %92, %91 : vector<16x384xf32>
    %94 = arith.addf %89, %93 : vector<16x384xf32>
    %95 = vector.extract_strided_slice %1 {offsets = [0, 3], sizes = [16, 1], strides = [1, 1]} : vector<16x9xf32> to vector<16x1xf32>
    %c0_40 = arith.constant 0 : index
    %c127_41 = arith.constant 127 : index
    %96 = vector.load %arg8[%c0_40, %c127_41] : memref<16x640xf32, #tpu.memory_space<vmem>>, vector<16x384xf32>
    %97 = vector.broadcast %95 : vector<16x1xf32> to vector<16x384xf32>
    %98 = arith.mulf %97, %96 : vector<16x384xf32>
    %99 = arith.addf %94, %98 : vector<16x384xf32>
    %100 = vector.extract_strided_slice %1 {offsets = [0, 4], sizes = [16, 1], strides = [1, 1]} : vector<16x9xf32> to vector<16x1xf32>
    %c0_42 = arith.constant 0 : index
    %c128_43 = arith.constant 128 : index
    %101 = vector.load %arg8[%c0_42, %c128_43] : memref<16x640xf32, #tpu.memory_space<vmem>>, vector<16x384xf32>
    %102 = vector.broadcast %100 : vector<16x1xf32> to vector<16x384xf32>
    %103 = arith.mulf %102, %101 : vector<16x384xf32>
    %104 = arith.addf %99, %103 : vector<16x384xf32>
    %105 = vector.extract_strided_slice %1 {offsets = [0, 5], sizes = [16, 1], strides = [1, 1]} : vector<16x9xf32> to vector<16x1xf32>
    %c0_44 = arith.constant 0 : index
    %c129_45 = arith.constant 129 : index
    %106 = vector.load %arg8[%c0_44, %c129_45] : memref<16x640xf32, #tpu.memory_space<vmem>>, vector<16x384xf32>
    %107 = vector.broadcast %105 : vector<16x1xf32> to vector<16x384xf32>
    %108 = arith.mulf %107, %106 : vector<16x384xf32>
    %109 = arith.addf %104, %108 : vector<16x384xf32>
    %110 = vector.extract_strided_slice %1 {offsets = [0, 6], sizes = [16, 1], strides = [1, 1]} : vector<16x9xf32> to vector<16x1xf32>
    %c0_46 = arith.constant 0 : index
    %c145_47 = arith.constant 145 : index
    %111 = vector.load %arg8[%c0_46, %c145_47] : memref<16x640xf32, #tpu.memory_space<vmem>>, vector<16x384xf32>
    %112 = vector.broadcast %110 : vector<16x1xf32> to vector<16x384xf32>
    %113 = arith.mulf %112, %111 : vector<16x384xf32>
    %114 = arith.addf %109, %113 : vector<16x384xf32>
    %115 = vector.extract_strided_slice %1 {offsets = [0, 7], sizes = [16, 1], strides = [1, 1]} : vector<16x9xf32> to vector<16x1xf32>
    %c0_48 = arith.constant 0 : index
    %c146_49 = arith.constant 146 : index
    %116 = vector.load %arg8[%c0_48, %c146_49] : memref<16x640xf32, #tpu.memory_space<vmem>>, vector<16x384xf32>
    %117 = vector.broadcast %115 : vector<16x1xf32> to vector<16x384xf32>
    %118 = arith.mulf %117, %116 : vector<16x384xf32>
    %119 = arith.addf %114, %118 : vector<16x384xf32>
    %120 = vector.extract_strided_slice %1 {offsets = [0, 8], sizes = [16, 1], strides = [1, 1]} : vector<16x9xf32> to vector<16x1xf32>
    %c0_50 = arith.constant 0 : index
    %c147_51 = arith.constant 147 : index
    %121 = vector.load %arg8[%c0_50, %c147_51] : memref<16x640xf32, #tpu.memory_space<vmem>>, vector<16x384xf32>
    %122 = vector.broadcast %120 : vector<16x1xf32> to vector<16x384xf32>
    %123 = arith.mulf %122, %121 : vector<16x384xf32>
    %124 = arith.addf %119, %123 : vector<16x384xf32>
    %cst_52 = arith.constant dense<0.000000e+00> : vector<384xf32>
    %125 = vector.multi_reduction <add>, %124, %cst_52 [0] : vector<16x384xf32> to vector<384xf32>
    %126 = vector.shape_cast %125 : vector<384xf32> to vector<1x384xf32>
    %c0_53 = arith.constant 0 : index
    %c0_54 = arith.constant 0 : index
    %127 = vector.load %arg5[%c0_53, %c0_54] : memref<1x1xf32, #tpu.memory_space<vmem>>, vector<1x1xf32>
    %128 = vector.broadcast %127 : vector<1x1xf32> to vector<1x384xf32>
    %129 = arith.addf %126, %128 : vector<1x384xf32>
    %c0_55 = arith.constant 0 : index
    %c0_56 = arith.constant 0 : index
    %c0_57 = arith.constant 0 : index
    %130 = vector.load %arg7[%c0_55, %c0_56, %c0_57] : memref<1x1x384xf32, #tpu.memory_space<vmem>>, vector<1x1x384xf32>
    %131 = vector.shape_cast %130 : vector<1x1x384xf32> to vector<1x384xf32>
    %132 = vector.shape_cast %129 : vector<1x384xf32> to vector<1x1x384xf32>
    tpu.vector_store %arg7[%c0_55, %c0_56, %c0_57], %132 {strides = array<i32>} : memref<1x1x384xf32, #tpu.memory_space<vmem>>, vector<1x1x384xf32>,
    return
  }
  func.func @transform_0(%arg0: i32) -> (i32, i32, i32) {
    %c0_i32 = arith.constant 0 : i32
    %c0_i32_0 = arith.constant 0 : i32
    %c0_i32_1 = arith.constant 0 : i32
    return %arg0, %c0_i32, %c0_i32_0 : i32, i32, i32
  }
  func.func @transform_1(%arg0: i32) -> (i32, i32) {
    %c0_i32 = arith.constant 0 : i32
    %c0_i32_0 = arith.constant 0 : i32
    %c0_i32_1 = arith.constant 0 : i32
    return %c0_i32, %c0_i32_0 : i32, i32
  }
  func.func @transform_2(%arg0: i32) -> (i32, i32) {
    %c0_i32 = arith.constant 0 : i32
    %c0_i32_0 = arith.constant 0 : i32
    %c0_i32_1 = arith.constant 0 : i32
    return %c0_i32, %c0_i32_0 : i32, i32
  }
  func.func @transform_3(%arg0: i32) -> (i32, i32) {
    %c0_i32 = arith.constant 0 : i32
    %c0_i32_0 = arith.constant 0 : i32
    %c0_i32_1 = arith.constant 0 : i32
    return %c0_i32, %c0_i32_0 : i32, i32
  }
  func.func @transform_4(%arg0: i32) -> (i32, i32) {
    %c0_i32 = arith.constant 0 : i32
    %c0_i32_0 = arith.constant 0 : i32
    %c0_i32_1 = arith.constant 0 : i32
    return %c0_i32, %c0_i32_0 : i32, i32
  }
  func.func @transform_5(%arg0: i32) -> (i32, i32) {
    %c0_i32 = arith.constant 0 : i32
    %c0_i32_0 = arith.constant 0 : i32
    %c0_i32_1 = arith.constant 0 : i32
    return %c0_i32, %c0_i32_0 : i32, i32
  }
  func.func @transform_6(%arg0: i32) -> (i32, i32, i32) {
    %c0_i32 = arith.constant 0 : i32
    %c0_i32_0 = arith.constant 0 : i32
    %c0_i32_1 = arith.constant 0 : i32
    return %arg0, %c0_i32, %c0_i32_0 : i32, i32, i32
  }
}

</mosaic_0001>

<llo_original>
// kernel: tpu_custom_call.1
$region0: #{tpu_custom_call.1}
  #allocation0 [shape = 'u32[]', space=smem, size = 0x4, offset = 0x4, fixed_abs, tag = 'smem constant byte address 0x4 - core index']
  #allocation1 [shape = 'u32[144,128]{1,0:T(1,128)}', space=vmem, size = 0x12000, scoped, tag = 'internal scratch']
  #allocation2 [shape = 'f32[16,640]{1,0:T(8,128)}', space=vmem, size = 0xa000, scoped, tag = 'scratch operand']
  #allocation3 [shape = 'f32[1,1]{1,0:T(1,128)S(1)}', space=vmem, size = 0x200, scoped, tag = 'scoped memory for tpu_custom_call.1']
  %s0 = inlined_call_operand.hbm [shape: f32[2,1,640], index: 0, kind: input, shape index: {}]
  %s1 = inlined_call_operand.vmem [shape: f32[16,9], index: 1, kind: input, shape index: {}]
  %s2 = inlined_call_operand.vmem [shape: f32[16,1], index: 2, kind: input, shape index: {}]
  %s3 = inlined_call_operand.vmem [shape: f32[16,9], index: 3, kind: input, shape index: {}]
  %s4 = inlined_call_operand.<no memory space> [shape: f32[1,1], index: 4, kind: input, shape index: {}]
  %s5 = inlined_call_operand.vmem [shape: f32[1,384], index: 5, kind: input, shape index: {}]
  %s6 = inlined_call_operand.hbm [shape: f32[2,1,384], index: 6, kind: output, shape index: {}]
  %s7 = sld [smem:[#allocation0]]
  $region61: #{tpu_custom_call.1} parent=0
    _
  %s9 = ssub.s32 1, %s7
  %s10 = scalar_select 0, %s9, %s7
  %v11 = vstv %s4
  %12 = vst [vmem:[#allocation3] sm:$0x1] %v11
  $region1: #{tpu_custom_call.1} parent=0
    #allocation4 [shape = 'u8[5120]{0}', space=vmem, size = 0x1400, scoped, tag = 'input window, operand 0']
    #allocation5 [shape = 's32[2]{0}', space=sflag, size = 0x8, scoped, tag = 'scoped memory for tpu_custom_call.1']
    #allocation6 [shape = 's32[2]{0}', space=sflag, size = 0x8, scoped, tag = 'scoped memory for tpu_custom_call.1']
    #allocation7 [shape = 'u8[3072]{0}', space=vmem, size = 0xc00, scoped, tag = 'output window, operand 0']
    %13 = vsyncpa [#allocation5], 0
    %s14 = scalar_lea.sflag [#allocation5], 1
    %15 = vsyncpa %s14, 0
    %16 = vsyncpa [#allocation6], 0
    %s17 = scalar_lea.sflag [#allocation6], 1
    %18 = vsyncpa %s17, 0
    loop: start=0, step=1, limit=4
    $region2: #{tpu_custom_call.1} parent=1 // loop_pre_header
      _
    $region3: #{tpu_custom_call.1} parent=1 // loop_header
      %s20 = sphi 0, %s24
      %p21 = scmp.ge.s32.totalorder %s20, 4
      %s30 = sphi 0, %s32
      %s33 = sphi 0, %s30
      %s34 = sphi 0, %s33
      %s50 = sphi 0, %s34
      %s54 = sphi 0, %s54
      %s56 = sphi 0, %s54
      %s57 = sphi 0, %s56
      %s71 = sphi 0, %s57
      %s75 = sphi 0, %s75
      %s77 = sphi 0, %s75
      %s78 = sphi 0, %s77
      %s92 = sphi 0, %s78
      %s96 = sphi 0, %s96
      %s98 = sphi 0, %s96
      %s99 = sphi 0, %s98
      %s113 = sphi 0, %s99
      %s117 = sphi 0, %s117
      %s119 = sphi 0, %s117
      %s120 = sphi 0, %s119
      %s134 = sphi 0, %s120
      %s138 = sphi 0, %s138
      %s140 = sphi 0, %s138
      %s141 = sphi 0, %s140
      %s155 = sphi 0, %s141
      %s161 = sphi 0, %s163
      %s164 = sphi 0, %s161
      %s165 = sphi 0, %s164
      %s181 = sphi 0, %s165
    $region4: #{tpu_custom_call.1} parent=1 // loop_header_branch
      %23 = sbr.rel (%p21) target = $region8
    $region5: #{tpu_custom_call.1} parent=1 // loop_body
      %s25 = ssub.s32 %s20, 1
      %s26 = ssub.s32 %s20, 2
      %s27 = sadd.s32 %s20, 1
      %s28 = ssub.s32 %s20, %s27
      %p29 = scmp.eq.s32.totalorder %s28, 0
      %s31 = sadd.s32 %s30, 1
      %s32 = scalar_select %p29, %s30, %s31
      %p35 = pneg %p29
      %p36 = scmp.eq.s32.totalorder %s20, 1
      %p37 = por %p35, %p36
      %p38 = scmp.ne.s32.totalorder %s30, %s33
      %p39 = scmp.eq.s32.totalorder %s20, 0
      %p40 = por %p38, %p39
      %p41 = scmp.ne.s32.totalorder %s30, %s33
      %p42 = scmp.eq.s32.totalorder %s25, 1
      %p43 = por %p41, %p42
      %p44 = scmp.ne.s32.totalorder %s33, %s34
      %p45 = scmp.eq.s32.totalorder %s25, 0
      %p46 = por %p44, %p45
      %p47 = scmp.ne.s32.totalorder %s33, %s34
      %p48 = scmp.eq.s32.totalorder %s26, 1
      %p49 = por %p47, %p48
      %p51 = scmp.ne.s32.totalorder %s34, %s50
      %p52 = scmp.eq.s32.totalorder %s26, 0
      %p53 = por %p51, %p52
      %s55 = sadd.s32 %s54, 1
      %p58 = scmp.eq.s32.totalorder %s20, 1
      %p59 = scmp.ne.s32.totalorder %s54, %s56
      %p60 = scmp.eq.s32.totalorder %s20, 0
      %p61 = por %p59, %p60
      %p62 = scmp.ne.s32.totalorder %s54, %s56
      %p63 = scmp.eq.s32.totalorder %s25, 1
      %p64 = por %p62, %p63
      %p65 = scmp.ne.s32.totalorder %s56, %s57
      %p66 = scmp.eq.s32.totalorder %s25, 0
      %p67 = por %p65, %p66
      %p68 = scmp.ne.s32.totalorder %s56, %s57
      %p69 = scmp.eq.s32.totalorder %s26, 1
      %p70 = por %p68, %p69
      %p72 = scmp.ne.s32.totalorder %s57, %s71
      %p73 = scmp.eq.s32.totalorder %s26, 0
      %p74 = por %p72, %p73
      %s76 = sadd.s32 %s75, 1
      %p79 = scmp.eq.s32.totalorder %s20, 1
      %p80 = scmp.ne.s32.totalorder %s75, %s77
      %p81 = scmp.eq.s32.totalorder %s20, 0
      %p82 = por %p80, %p81
      %p83 = scmp.ne.s32.totalorder %s75, %s77
      %p84 = scmp.eq.s32.totalorder %s25, 1
      %p85 = por %p83, %p84
      %p86 = scmp.ne.s32.totalorder %s77, %s78
      %p87 = scmp.eq.s32.totalorder %s25, 0
      %p88 = por %p86, %p87
      %p89 = scmp.ne.s32.totalorder %s77, %s78
      %p90 = scmp.eq.s32.totalorder %s26, 1
      %p91 = por %p89, %p90
      %p93 = scmp.ne.s32.totalorder %s78, %s92
      %p94 = scmp.eq.s32.totalorder %s26, 0
      %p95 = por %p93, %p94
      %s97 = sadd.s32 %s96, 1
      %p100 = scmp.eq.s32.totalorder %s20, 1
      %p101 = scmp.ne.s32.totalorder %s96, %s98
      %p102 = scmp.eq.s32.totalorder %s20, 0
      %p103 = por %p101, %p102
      %p104 = scmp.ne.s32.totalorder %s96, %s98
      %p105 = scmp.eq.s32.totalorder %s25, 1
      %p106 = por %p104, %p105
      %p107 = scmp.ne.s32.totalorder %s98, %s99
      %p108 = scmp.eq.s32.totalorder %s25, 0
      %p109 = por %p107, %p108
      %p110 = scmp.ne.s32.totalorder %s98, %s99
      %p111 = scmp.eq.s32.totalorder %s26, 1
      %p112 = por %p110, %p111
      %p114 = scmp.ne.s32.totalorder %s99, %s113
      %p115 = scmp.eq.s32.totalorder %s26, 0
      %p116 = por %p114, %p115
      %s118 = sadd.s32 %s117, 1
      %p121 = scmp.eq.s32.totalorder %s20, 1
      %p122 = scmp.ne.s32.totalorder %s117, %s119
      %p123 = scmp.eq.s32.totalorder %s20, 0
      %p124 = por %p122, %p123
      %p125 = scmp.ne.s32.totalorder %s117, %s119
      %p126 = scmp.eq.s32.totalorder %s25, 1
      %p127 = por %p125, %p126
      %p128 = scmp.ne.s32.totalorder %s119, %s120
      %p129 = scmp.eq.s32.totalorder %s25, 0
      %p130 = por %p128, %p129
      %p131 = scmp.ne.s32.totalorder %s119, %s120
      %p132 = scmp.eq.s32.totalorder %s26, 1
      %p133 = por %p131, %p132
      %p135 = scmp.ne.s32.totalorder %s120, %s134
      %p136 = scmp.eq.s32.totalorder %s26, 0
      %p137 = por %p135, %p136
      %s139 = sadd.s32 %s138, 1
      %p142 = scmp.eq.s32.totalorder %s20, 1
      %p143 = scmp.ne.s32.totalorder %s138, %s140
      %p144 = scmp.eq.s32.totalorder %s20, 0
      %p145 = por %p143, %p144
      %p146 = scmp.ne.s32.totalorder %s138, %s140
      %p147 = scmp.eq.s32.totalorder %s25, 1
      %p148 = por %p146, %p147
      %p149 = scmp.ne.s32.totalorder %s140, %s141
      %p150 = scmp.eq.s32.totalorder %s25, 0
      %p151 = por %p149, %p150
      %p152 = scmp.ne.s32.totalorder %s140, %s141
      %p153 = scmp.eq.s32.totalorder %s26, 1
      %p154 = por %p152, %p153
      %p156 = scmp.ne.s32.totalorder %s141, %s155
      %p157 = scmp.eq.s32.totalorder %s26, 0
      %p158 = por %p156, %p157
      %s159 = ssub.s32 %s20, %s27
      %p160 = scmp.eq.s32.totalorder %s159, 0
      %s162 = sadd.s32 %s161, 1
      %s163 = scalar_select %p160, %s161, %s162
      %p166 = pneg %p160
      %p167 = scmp.eq.s32.totalorder %s20, 1
      %p168 = por %p166, %p167
      %p169 = scmp.ne.s32.totalorder %s161, %s164
      %p170 = scmp.eq.s32.totalorder %s20, 0
      %p171 = por %p169, %p170
      %p172 = scmp.ne.s32.totalorder %s161, %s164
      %p173 = scmp.eq.s32.totalorder %s25, 1
      %p174 = por %p172, %p173
      %p175 = scmp.ne.s32.totalorder %s164, %s165
      %p176 = scmp.eq.s32.totalorder %s25, 0
      %p177 = por %p175, %p176
      %p178 = scmp.ne.s32.totalorder %s164, %s165
      %p179 = scmp.eq.s32.totalorder %s26, 1
      %p180 = por %p178, %p179
      %p182 = scmp.ne.s32.totalorder %s165, %s181
      %p183 = scmp.eq.s32.totalorder %s26, 0
      %p184 = por %p182, %p183
      %p185 = scmp.le.s32.totalorder 1, %s20
      %p186 = scmp.lt.s32.totalorder %s20, 3
      %p187 = pnand %p185, %p186
      %p188 = pneg %p187
      // Predicated region
      $region9: #{tpu_custom_call.1} parent=5 // pred_check
        _
      $region10: #{tpu_custom_call.1} parent=5 // pred_check_branch
        %190 = sbr.rel (%p187) target = $region12
      $region11: #{tpu_custom_call.1} parent=5 // pred_region
        %s191 = ssub.s32 %s20, 1
        // Predicated region
        $region13: #{tpu_custom_call.1} parent=11 // pred_check
          %p192 = pneg %p67
        $region14: #{tpu_custom_call.1} parent=11 // pred_check_branch
          %194 = sbr.rel (%p192) target = $region16
        $region15: #{tpu_custom_call.1} parent=11 // pred_region
          _
        $region16: #{tpu_custom_call.1} parent=11 // pred_fallthru
          _
        // Predicated region
        $region17: #{tpu_custom_call.1} parent=11 // pred_check
          %p195 = pneg %p88
        $region18: #{tpu_custom_call.1} parent=11 // pred_check_branch
          %197 = sbr.rel (%p195) target = $region20
        $region19: #{tpu_custom_call.1} parent=11 // pred_region
          _
        $region20: #{tpu_custom_call.1} parent=11 // pred_fallthru
          _
        // Predicated region
        $region21: #{tpu_custom_call.1} parent=11 // pred_check
          %p198 = pneg %p109
        $region22: #{tpu_custom_call.1} parent=11 // pred_check_branch
          %200 = sbr.rel (%p198) target = $region24
        $region23: #{tpu_custom_call.1} parent=11 // pred_region
          _
        $region24: #{tpu_custom_call.1} parent=11 // pred_fallthru
          _
        // Predicated region
        $region25: #{tpu_custom_call.1} parent=11 // pred_check
          %p201 = pneg %p130
        $region26: #{tpu_custom_call.1} parent=11 // pred_check_branch
          %203 = sbr.rel (%p201) target = $region28
        $region27: #{tpu_custom_call.1} parent=11 // pred_region
          _
        $region28: #{tpu_custom_call.1} parent=11 // pred_fallthru
          _
        // Predicated region
        $region29: #{tpu_custom_call.1} parent=11 // pred_check
          %p204 = pneg %p151
        $region30: #{tpu_custom_call.1} parent=11 // pred_check_branch
          %206 = sbr.rel (%p204) target = $region32
        $region31: #{tpu_custom_call.1} parent=11 // pred_region
          _
        $region32: #{tpu_custom_call.1} parent=11 // pred_fallthru
          _
      $region12: #{tpu_custom_call.1} parent=5 // pred_fallthru
        _
      %p207 = scmp.lt.s32.totalorder %s20, 2
      // Predicated region
      $region33: #{tpu_custom_call.1} parent=5 // pred_check
        %p208 = pneg %p207
      $region34: #{tpu_custom_call.1} parent=5 // pred_check_branch
        %210 = sbr.rel (%p208) target = $region36
      $region35: #{tpu_custom_call.1} parent=5 // pred_region
        // Predicated region
        $region37: #{tpu_custom_call.1} parent=35 // pred_check
          %p211 = pneg %p40
        $region38: #{tpu_custom_call.1} parent=35 // pred_check_branch
          %213 = sbr.rel (%p211) target = $region40
        $region39: #{tpu_custom_call.1} parent=35 // pred_region
          %s214 = sand.u32 %s30, 1
          %s215 = scalar_lea.sflag [#allocation5], %s214
          %s216 = sand.u32 %s30, 1
          %s217 = smul.addr %s216, 5
          %s218 = scalar_lea.vmem [#allocation4], %s217
          %s220 = ssub.s32 80, 80
          %221 = vsyncadd %s215, %s220
          %s222 = smul.addr %s20, 5
          %s223 = smul.addr %s222, 16
          %s224 = scalar_lea.hbm %s0, %s223
          %s226 = sshll.u32 %s218, 4
          %s227 = int_to_ptr.vmem [resolvable:$true] %s226
          %229 = dma.hbm_to_vmem [thread:$0]  %s224, 80, %s227, %s215
        $region40: #{tpu_custom_call.1} parent=35 // pred_fallthru
          _
      $region36: #{tpu_custom_call.1} parent=5 // pred_fallthru
        _
      %p230 = scmp.le.s32.totalorder 1, %s20
      %p231 = scmp.lt.s32.totalorder %s20, 3
      %p232 = pnand %p230, %p231
      %p233 = pneg %p232
      // Predicated region
      $region41: #{tpu_custom_call.1} parent=5 // pred_check
        _
      $region42: #{tpu_custom_call.1} parent=5 // pred_check_branch
        %235 = sbr.rel (%p232) target = $region44
      $region43: #{tpu_custom_call.1} parent=5 // pred_region
        %s236 = ssub.s32 %s20, 1
        %s237 = sand.u32 %s33, 1
        %s238 = scalar_lea.sflag [#allocation5], %s237
        %s239 = sand.u32 %s33, 1
        %s240 = smul.addr %s239, 5
        %s241 = scalar_lea.vmem [#allocation4], %s240
        // Predicated region
        $region45: #{tpu_custom_call.1} parent=43 // pred_check
          %p242 = pneg %p46
        $region46: #{tpu_custom_call.1} parent=43 // pred_check_branch
          %244 = sbr.rel (%p242) target = $region48
        $region47: #{tpu_custom_call.1} parent=43 // pred_region
          %245 = dma.done %s238, 80
        $region48: #{tpu_custom_call.1} parent=43 // pred_fallthru
          _
        %s246 = sand.u32 %s33, 1
        %s247 = scalar_lea.sflag [#allocation5], %s246
        %s248 = sand.u32 %s33, 1
        %s249 = smul.addr %s248, 5
        %s250 = scalar_lea.vmem [#allocation4], %s249
        %p251 = pneg %p46
        %p252 = pneg %p43
        %p253 = pneg %p67
        %p254 = pneg %p64
        %p255 = pneg %p88
        %p256 = pneg %p85
        %p257 = pneg %p109
        %p258 = pneg %p106
        %p259 = pneg %p130
        %p260 = pneg %p127
        %p261 = pneg %p151
        %p262 = pneg %p148
        %p263 = pneg %p177
        %p264 = pneg %p174
        %s265 = sand.u32 %s164, 1
        %s266 = scalar_lea.sflag [#allocation6], %s265
        %s267 = sand.u32 %s164, 1
        %s268 = smul.addr %s267, 3
        %s269 = scalar_lea.vmem [#allocation7], %s268
        %v270 = vld [vmem:[%s1] sm:$0xff]
        %v271 = vld [vmem:[%s1 + $0x8] sm:$0xff]
        %v272 = vld [vmem:[%s3] sm:$0xff]
        %v273 = vld [vmem:[%s3 + $0x8] sm:$0xff]
        %v274 = vld [vmem:[%s241] sm:$0xf]
        %276 = vset.pattern.permute.xlu0 0
        %277 = vperm.xlu0 %276, %v270
        %v278 = vpop.permute.xlu0 %277
        %281 = vset.pattern.permute.xlu0 0
        %282 = vperm.xlu0 %281, %v271
        %v283 = vpop.permute.xlu0 %282
        %v286 = vlaneseq
        %v287 = vshrl.u32 %v286, 7
        %v288 = vsub.s32 0, %v287
        %v289 = vrot.slane %v274, %v288
        %v290 = vlaneseq
        %v291 = vshrl.u32 %v290, 7
        %v292 = vsub.s32 1, %v291
        %v293 = vrot.slane %v274, %v292
        %v294 = vlaneseq
        %v295 = vshrl.u32 %v294, 7
        %v296 = vsub.s32 2, %v295
        %v297 = vrot.slane %v274, %v296
        %v298 = vlaneseq
        %v299 = vshrl.u32 %v298, 7
        %v300 = vsub.s32 3, %v299
        %v301 = vrot.slane %v274, %v300
        %v306 = vmul.f32 %v278, %v289
        %v307 = vmul.f32 %v278, %v293
        %v308 = vmul.f32 %v278, %v297
        %v309 = vmul.f32 %v278, %v301
        %v310 = vmul.f32 %v283, %v289
        %v311 = vmul.f32 %v283, %v293
        %v312 = vmul.f32 %v283, %v297
        %v313 = vmul.f32 %v283, %v301
        %v314 = vadd.f32 %v306, 0.0
        %v315 = vadd.f32 %v307, 0.0
        %v316 = vadd.f32 %v308, 0.0
        %v317 = vadd.f32 %v309, 0.0
        %v318 = vadd.f32 %v310, 0.0
        %v319 = vadd.f32 %v311, 0.0
        %v320 = vadd.f32 %v312, 0.0
        %v321 = vadd.f32 %v313, 0.0
        %322 = vset.pattern.permute.xlu0 1
        %323 = vperm.xlu0 %322, %v270
        %v324 = vpop.permute.xlu0 %323
        %326 = vset.pattern.permute.xlu0 1
        %327 = vperm.xlu0 %326, %v271
        %v328 = vpop.permute.xlu0 %327
        %v330 = vmul.f32 %v324, %v289
        %v331 = vmul.f32 %v324, %v293
        %v332 = vmul.f32 %v324, %v297
        %v333 = vmul.f32 %v324, %v301
        %v334 = vmul.f32 %v328, %v289
        %v335 = vmul.f32 %v328, %v293
        %v336 = vmul.f32 %v328, %v297
        %v337 = vmul.f32 %v328, %v301
        %346 = vrot.lane.b32.xlu0 %v330, 127
        %v347 = vpop.permute.xlu0 %346
        %348 = vrot.lane.b32.xlu0 %v331, 127
        %v349 = vpop.permute.xlu0 %348
        %350 = vrot.lane.b32.xlu0 %v332, 127
        %v351 = vpop.permute.xlu0 %350
        %352 = vrot.lane.b32.xlu0 %v333, 127
        %v353 = vpop.permute.xlu0 %352
        %354 = vrot.lane.b32.xlu0 %v334, 127
        %v355 = vpop.permute.xlu0 %354
        %356 = vrot.lane.b32.xlu0 %v335, 127
        %v357 = vpop.permute.xlu0 %356
        %358 = vrot.lane.b32.xlu0 %v336, 127
        %v359 = vpop.permute.xlu0 %358
        %360 = vrot.lane.b32.xlu0 %v337, 127
        %v361 = vpop.permute.xlu0 %360
        %vm362 = vcmask 1039360
        %v363 = vsel %vm362, %v347, %v349
        %v364 = vsel %vm362, %v349, %v351
        %v365 = vsel %vm362, %v351, %v353
        %v366 = vsel %vm362, %v355, %v357
        %v367 = vsel %vm362, %v357, %v359
        %v368 = vsel %vm362, %v359, %v361
        %v377 = vadd.f32 %v314, %v363
        %v378 = vadd.f32 %v315, %v364
        %v379 = vadd.f32 %v316, %v365
        %v380 = vadd.f32 %v317, %v353
        %v381 = vadd.f32 %v318, %v366
        %v382 = vadd.f32 %v319, %v367
        %v383 = vadd.f32 %v320, %v368
        %v384 = vadd.f32 %v321, %v361
        %385 = vset.pattern.permute.xlu0 2
        %386 = vperm.xlu0 %385, %v270
        %v387 = vpop.permute.xlu0 %386
        %389 = vset.pattern.permute.xlu0 2
        %390 = vperm.xlu0 %389, %v271
        %v391 = vpop.permute.xlu0 %390
        %v393 = vmul.f32 %v387, %v289
        %v394 = vmul.f32 %v387, %v293
        %v395 = vmul.f32 %v387, %v297
        %v396 = vmul.f32 %v387, %v301
        %v397 = vmul.f32 %v391, %v289
        %v398 = vmul.f32 %v391, %v293
        %v399 = vmul.f32 %v391, %v297
        %v400 = vmul.f32 %v391, %v301
        %409 = vrot.lane.b32.xlu0 %v393, 126
        %v410 = vpop.permute.xlu0 %409
        %411 = vrot.lane.b32.xlu0 %v394, 126
        %v412 = vpop.permute.xlu0 %411
        %413 = vrot.lane.b32.xlu0 %v395, 126
        %v414 = vpop.permute.xlu0 %413
        %415 = vrot.lane.b32.xlu0 %v396, 126
        %v416 = vpop.permute.xlu0 %415
        %417 = vrot.lane.b32.xlu0 %v397, 126
        %v418 = vpop.permute.xlu0 %417
        %419 = vrot.lane.b32.xlu0 %v398, 126
        %v420 = vpop.permute.xlu0 %419
        %421 = vrot.lane.b32.xlu0 %v399, 126
        %v422 = vpop.permute.xlu0 %421
        %423 = vrot.lane.b32.xlu0 %v400, 126
        %v424 = vpop.permute.xlu0 %423
        %vm425 = vcmask 1031168
        %v426 = vsel %vm425, %v410, %v412
        %v427 = vsel %vm425, %v412, %v414
        %v428 = vsel %vm425, %v414, %v416
        %v429 = vsel %vm425, %v418, %v420
        %v430 = vsel %vm425, %v420, %v422
        %v431 = vsel %vm425, %v422, %v424
        %v440 = vadd.f32 %v377, %v426
        %v441 = vadd.f32 %v378, %v427
        %v442 = vadd.f32 %v379, %v428
        %v443 = vadd.f32 %v380, %v416
        %v444 = vadd.f32 %v381, %v429
        %v445 = vadd.f32 %v382, %v430
        %v446 = vadd.f32 %v383, %v431
        %v447 = vadd.f32 %v384, %v424
        %448 = vset.pattern.permute.xlu0 3
        %449 = vperm.xlu0 %448, %v270
        %v450 = vpop.permute.xlu0 %449
        %452 = vset.pattern.permute.xlu0 3
        %453 = vperm.xlu0 %452, %v271
        %v454 = vpop.permute.xlu0 %453
        %v456 = vmul.f32 %v450, %v289
        %v457 = vmul.f32 %v450, %v293
        %v458 = vmul.f32 %v450, %v297
        %v459 = vmul.f32 %v450, %v301
        %v460 = vmul.f32 %v454, %v289
        %v461 = vmul.f32 %v454, %v293
        %v462 = vmul.f32 %v454, %v297
        %v463 = vmul.f32 %v454, %v301
        %472 = vrot.lane.b32.xlu0 %v456, 110
        %v473 = vpop.permute.xlu0 %472
        %474 = vrot.lane.b32.xlu0 %v457, 110
        %v475 = vpop.permute.xlu0 %474
        %476 = vrot.lane.b32.xlu0 %v458, 110
        %v477 = vpop.permute.xlu0 %476
        %478 = vrot.lane.b32.xlu0 %v459, 110
        %v479 = vpop.permute.xlu0 %478
        %480 = vrot.lane.b32.xlu0 %v460, 110
        %v481 = vpop.permute.xlu0 %480
        %482 = vrot.lane.b32.xlu0 %v461, 110
        %v483 = vpop.permute.xlu0 %482
        %484 = vrot.lane.b32.xlu0 %v462, 110
        %v485 = vpop.permute.xlu0 %484
        %486 = vrot.lane.b32.xlu0 %v463, 110
        %v487 = vpop.permute.xlu0 %486
        %vm488 = vcmask 900096
        %v489 = vsel %vm488, %v473, %v475
        %v490 = vsel %vm488, %v475, %v477
        %v491 = vsel %vm488, %v477, %v479
        %v492 = vsel %vm488, %v481, %v483
        %v493 = vsel %vm488, %v483, %v485
        %v494 = vsel %vm488, %v485, %v487
        %v503 = vadd.f32 %v440, %v489
        %v504 = vadd.f32 %v441, %v490
        %v505 = vadd.f32 %v442, %v491
        %v506 = vadd.f32 %v443, %v479
        %v507 = vadd.f32 %v444, %v492
        %v508 = vadd.f32 %v445, %v493
        %v509 = vadd.f32 %v446, %v494
        %v510 = vadd.f32 %v447, %v487
        %v511 = vld [vmem:[%s241 + $0x1] sm:$0x7]
        %512 = vset.pattern.permute.xlu0 4
        %513 = vperm.xlu0 %512, %v270
        %v514 = vpop.permute.xlu0 %513
        %516 = vset.pattern.permute.xlu0 4
        %517 = vperm.xlu0 %516, %v271
        %v518 = vpop.permute.xlu0 %517
        %v521 = vlaneseq
        %v522 = vshrl.u32 %v521, 7
        %v523 = vsub.s32 0, %v522
        %v524 = vrot.slane %v511, %v523
        %v525 = vlaneseq
        %v526 = vshrl.u32 %v525, 7
        %v527 = vsub.s32 1, %v526
        %v528 = vrot.slane %v511, %v527
        %v529 = vlaneseq
        %v530 = vshrl.u32 %v529, 7
        %v531 = vsub.s32 2, %v530
        %v532 = vrot.slane %v511, %v531
        %v536 = vmul.f32 %v514, %v524
        %v537 = vmul.f32 %v514, %v528
        %v538 = vmul.f32 %v514, %v532
        %v539 = vmul.f32 %v518, %v524
        %v540 = vmul.f32 %v518, %v528
        %v541 = vmul.f32 %v518, %v532
        %548 = vrot.lane.b32.xlu0 %v536, 109
        %v549 = vpop.permute.xlu0 %548
        %550 = vrot.lane.b32.xlu0 %v537, 109
        %v551 = vpop.permute.xlu0 %550
        %552 = vrot.lane.b32.xlu0 %v538, 109
        %v553 = vpop.permute.xlu0 %552
        %554 = vrot.lane.b32.xlu0 %v539, 109
        %v555 = vpop.permute.xlu0 %554
        %556 = vrot.lane.b32.xlu0 %v540, 109
        %v557 = vpop.permute.xlu0 %556
        %558 = vrot.lane.b32.xlu0 %v541, 109
        %v559 = vpop.permute.xlu0 %558
        %vm560 = vcmask 891904
        %v561 = vsel %vm560, %v549, %v551
        %v562 = vsel %vm560, %v551, %v553
        %v563 = vsel %vm560, %v555, %v557
        %v564 = vsel %vm560, %v557, %v559
        %v573 = vadd.f32 %v503, %v549
        %v574 = vadd.f32 %v504, %v561
        %v575 = vadd.f32 %v505, %v562
        %v576 = vadd.f32 %v506, %v553
        %v577 = vadd.f32 %v507, %v555
        %v578 = vadd.f32 %v508, %v563
        %v579 = vadd.f32 %v509, %v564
        %v580 = vadd.f32 %v510, %v559
        %v581 = vld [vmem:[%s241 + $0x1] sm:$0xf]
        %582 = vset.pattern.permute.xlu0 5
        %583 = vperm.xlu0 %582, %v270
        %v584 = vpop.permute.xlu0 %583
        %586 = vset.pattern.permute.xlu0 5
        %587 = vperm.xlu0 %586, %v271
        %v588 = vpop.permute.xlu0 %587
        %v591 = vlaneseq
        %v592 = vshrl.u32 %v591, 7
        %v593 = vsub.s32 0, %v592
        %v594 = vrot.slane %v581, %v593
        %v595 = vlaneseq
        %v596 = vshrl.u32 %v595, 7
        %v597 = vsub.s32 1, %v596
        %v598 = vrot.slane %v581, %v597
        %v599 = vlaneseq
        %v600 = vshrl.u32 %v599, 7
        %v601 = vsub.s32 2, %v600
        %v602 = vrot.slane %v581, %v601
        %v603 = vlaneseq
        %v604 = vshrl.u32 %v603, 7
        %v605 = vsub.s32 3, %v604
        %v606 = vrot.slane %v581, %v605
        %v611 = vmul.f32 %v584, %v594
        %v612 = vmul.f32 %v584, %v598
        %v613 = vmul.f32 %v584, %v602
        %v614 = vmul.f32 %v584, %v606
        %v615 = vmul.f32 %v588, %v594
        %v616 = vmul.f32 %v588, %v598
        %v617 = vmul.f32 %v588, %v602
        %v618 = vmul.f32 %v588, %v606
        %627 = vrot.lane.b32.xlu0 %v611, 108
        %v628 = vpop.permute.xlu0 %627
        %629 = vrot.lane.b32.xlu0 %v612, 108
        %v630 = vpop.permute.xlu0 %629
        %631 = vrot.lane.b32.xlu0 %v613, 108
        %v632 = vpop.permute.xlu0 %631
        %633 = vrot.lane.b32.xlu0 %v614, 108
        %v634 = vpop.permute.xlu0 %633
        %635 = vrot.lane.b32.xlu0 %v615, 108
        %v636 = vpop.permute.xlu0 %635
        %637 = vrot.lane.b32.xlu0 %v616, 108
        %v638 = vpop.permute.xlu0 %637
        %639 = vrot.lane.b32.xlu0 %v617, 108
        %v640 = vpop.permute.xlu0 %639
        %641 = vrot.lane.b32.xlu0 %v618, 108
        %v642 = vpop.permute.xlu0 %641
        %vm643 = vcmask 883712
        %v644 = vsel %vm643, %v628, %v630
        %v645 = vsel %vm643, %v630, %v632
        %v646 = vsel %vm643, %v632, %v634
        %v647 = vsel %vm643, %v636, %v638
        %v648 = vsel %vm643, %v638, %v640
        %v649 = vsel %vm643, %v640, %v642
        %v658 = vadd.f32 %v573, %v628
        %v659 = vadd.f32 %v574, %v644
        %v660 = vadd.f32 %v575, %v645
        %v661 = vadd.f32 %v576, %v646
        %v662 = vadd.f32 %v577, %v636
        %v663 = vadd.f32 %v578, %v647
        %v664 = vadd.f32 %v579, %v648
        %v665 = vadd.f32 %v580, %v649
        %666 = vset.pattern.permute.xlu0 6
        %667 = vperm.xlu0 %666, %v270
        %v668 = vpop.permute.xlu0 %667
        %670 = vset.pattern.permute.xlu0 6
        %671 = vperm.xlu0 %670, %v271
        %v672 = vpop.permute.xlu0 %671
        %v674 = vmul.f32 %v668, %v594
        %v675 = vmul.f32 %v668, %v598
        %v676 = vmul.f32 %v668, %v602
        %v677 = vmul.f32 %v668, %v606
        %v678 = vmul.f32 %v672, %v594
        %v679 = vmul.f32 %v672, %v598
        %v680 = vmul.f32 %v672, %v602
        %v681 = vmul.f32 %v672, %v606
        %690 = vrot.lane.b32.xlu0 %v674, 92
        %v691 = vpop.permute.xlu0 %690
        %692 = vrot.lane.b32.xlu0 %v675, 92
        %v693 = vpop.permute.xlu0 %692
        %694 = vrot.lane.b32.xlu0 %v676, 92
        %v695 = vpop.permute.xlu0 %694
        %696 = vrot.lane.b32.xlu0 %v677, 92
        %v697 = vpop.permute.xlu0 %696
        %698 = vrot.lane.b32.xlu0 %v678, 92
        %v699 = vpop.permute.xlu0 %698
        %700 = vrot.lane.b32.xlu0 %v679, 92
        %v701 = vpop.permute.xlu0 %700
        %702 = vrot.lane.b32.xlu0 %v680, 92
        %v703 = vpop.permute.xlu0 %702
        %704 = vrot.lane.b32.xlu0 %v681, 92
        %v705 = vpop.permute.xlu0 %704
        %vm706 = vcmask 752640
        %v707 = vsel %vm706, %v691, %v693
        %v708 = vsel %vm706, %v693, %v695
        %v709 = vsel %vm706, %v695, %v697
        %v710 = vsel %vm706, %v699, %v701
        %v711 = vsel %vm706, %v701, %v703
        %v712 = vsel %vm706, %v703, %v705
        %v721 = vadd.f32 %v658, %v691
        %v722 = vadd.f32 %v659, %v707
        %v723 = vadd.f32 %v660, %v708
        %v724 = vadd.f32 %v661, %v709
        %v725 = vadd.f32 %v662, %v699
        %v726 = vadd.f32 %v663, %v710
        %v727 = vadd.f32 %v664, %v711
        %v728 = vadd.f32 %v665, %v712
        %729 = vset.pattern.permute.xlu0 7
        %730 = vperm.xlu0 %729, %v270
        %v731 = vpop.permute.xlu0 %730
        %733 = vset.pattern.permute.xlu0 7
        %734 = vperm.xlu0 %733, %v271
        %v735 = vpop.permute.xlu0 %734
        %v737 = vmul.f32 %v731, %v594
        %v738 = vmul.f32 %v731, %v598
        %v739 = vmul.f32 %v731, %v602
        %v740 = vmul.f32 %v731, %v606
        %v741 = vmul.f32 %v735, %v594
        %v742 = vmul.f32 %v735, %v598
        %v743 = vmul.f32 %v735, %v602
        %v744 = vmul.f32 %v735, %v606
        %753 = vrot.lane.b32.xlu0 %v737, 91
        %v754 = vpop.permute.xlu0 %753
        %755 = vrot.lane.b32.xlu0 %v738, 91
        %v756 = vpop.permute.xlu0 %755
        %757 = vrot.lane.b32.xlu0 %v739, 91
        %v758 = vpop.permute.xlu0 %757
        %759 = vrot.lane.b32.xlu0 %v740, 91
        %v760 = vpop.permute.xlu0 %759
        %761 = vrot.lane.b32.xlu0 %v741, 91
        %v762 = vpop.permute.xlu0 %761
        %763 = vrot.lane.b32.xlu0 %v742, 91
        %v764 = vpop.permute.xlu0 %763
        %765 = vrot.lane.b32.xlu0 %v743, 91
        %v766 = vpop.permute.xlu0 %765
        %767 = vrot.lane.b32.xlu0 %v744, 91
        %v768 = vpop.permute.xlu0 %767
        %vm769 = vcmask 744448
        %v770 = vsel %vm769, %v754, %v756
        %v771 = vsel %vm769, %v756, %v758
        %v772 = vsel %vm769, %v758, %v760
        %v773 = vsel %vm769, %v762, %v764
        %v774 = vsel %vm769, %v764, %v766
        %v775 = vsel %vm769, %v766, %v768
        %v784 = vadd.f32 %v721, %v754
        %v785 = vadd.f32 %v722, %v770
        %v786 = vadd.f32 %v723, %v771
        %v787 = vadd.f32 %v724, %v772
        %v788 = vadd.f32 %v725, %v762
        %v789 = vadd.f32 %v726, %v773
        %v790 = vadd.f32 %v727, %v774
        %v791 = vadd.f32 %v728, %v775
        %792 = vset.pattern.permute.xlu0 8
        %793 = vperm.xlu0 %792, %v270
        %v794 = vpop.permute.xlu0 %793
        %796 = vset.pattern.permute.xlu0 8
        %797 = vperm.xlu0 %796, %v271
        %v798 = vpop.permute.xlu0 %797
        %v800 = vmul.f32 %v794, %v594
        %v801 = vmul.f32 %v794, %v598
        %v802 = vmul.f32 %v794, %v602
        %v803 = vmul.f32 %v794, %v606
        %v804 = vmul.f32 %v798, %v594
        %v805 = vmul.f32 %v798, %v598
        %v806 = vmul.f32 %v798, %v602
        %v807 = vmul.f32 %v798, %v606
        %816 = vrot.lane.b32.xlu0 %v800, 90
        %v817 = vpop.permute.xlu0 %816
        %818 = vrot.lane.b32.xlu0 %v801, 90
        %v819 = vpop.permute.xlu0 %818
        %820 = vrot.lane.b32.xlu0 %v802, 90
        %v821 = vpop.permute.xlu0 %820
        %822 = vrot.lane.b32.xlu0 %v803, 90
        %v823 = vpop.permute.xlu0 %822
        %824 = vrot.lane.b32.xlu0 %v804, 90
        %v825 = vpop.permute.xlu0 %824
        %826 = vrot.lane.b32.xlu0 %v805, 90
        %v827 = vpop.permute.xlu0 %826
        %828 = vrot.lane.b32.xlu0 %v806, 90
        %v829 = vpop.permute.xlu0 %828
        %830 = vrot.lane.b32.xlu0 %v807, 90
        %v831 = vpop.permute.xlu0 %830
        %vm832 = vcmask 736256
        %v833 = vsel %vm832, %v817, %v819
        %v834 = vsel %vm832, %v819, %v821
        %v835 = vsel %vm832, %v821, %v823
        %v836 = vsel %vm832, %v825, %v827
        %v837 = vsel %vm832, %v827, %v829
        %v838 = vsel %vm832, %v829, %v831
        %v847 = vadd.f32 %v784, %v817
        %v848 = vadd.f32 %v785, %v833
        %v849 = vadd.f32 %v786, %v834
        %v850 = vadd.f32 %v787, %v835
        %v851 = vadd.f32 %v788, %v825
        %v852 = vadd.f32 %v789, %v836
        %v853 = vadd.f32 %v790, %v837
        %v854 = vadd.f32 %v791, %v838
        %v855 = vld [vmem:[%s2] sm:$0xff]
        %v856 = vld [vmem:[%s2 + $0x8] sm:$0xff]
        %858 = vset.pattern.permute.xlu0 0
        %859 = vperm.xlu0 %858, %v855
        %v860 = vpop.permute.xlu0 %859
        %863 = vset.pattern.permute.xlu0 0
        %864 = vperm.xlu0 %863, %v856
        %v865 = vpop.permute.xlu0 %864
        %v867 = vadd.f32 %v847, %v860
        %v868 = vadd.f32 %v848, %v860
        %v869 = vadd.f32 %v849, %v860
        %v870 = vadd.f32 %v850, %v860
        %v871 = vadd.f32 %v851, %v865
        %v872 = vadd.f32 %v852, %v865
        %v873 = vadd.f32 %v853, %v865
        %v874 = vadd.f32 %v854, %v865
        %v875 = vmax.f32 %v867, 0.0
        %v876 = vmax.f32 %v868, 0.0
        %v877 = vmax.f32 %v869, 0.0
        %v878 = vmax.f32 %v870, 0.0
        %v879 = vmax.f32 %v871, 0.0
        %v880 = vmax.f32 %v872, 0.0
        %v881 = vmax.f32 %v873, 0.0
        %v882 = vmax.f32 %v874, 0.0
        %v883 = vld [vmem:[%s5] sm:$0x7]
        %v885 = vlaneseq
        %v886 = vshrl.u32 %v885, 7
        %v887 = vsub.s32 0, %v886
        %v888 = vrot.slane %v883, %v887
        %v889 = vlaneseq
        %v890 = vshrl.u32 %v889, 7
        %v891 = vsub.s32 1, %v890
        %v892 = vrot.slane %v883, %v891
        %v893 = vlaneseq
        %v894 = vshrl.u32 %v893, 7
        %v895 = vsub.s32 2, %v894
        %v896 = vrot.slane %v883, %v895
        %897 = vrot.lane.b32.xlu0 %v888, 109
        %v898 = vpop.permute.xlu0 %897
        %899 = vrot.lane.b32.xlu0 %v892, 109
        %v900 = vpop.permute.xlu0 %899
        %901 = vrot.lane.b32.xlu0 %v896, 109
        %v902 = vpop.permute.xlu0 %901
        %v903 = vsel %vm560, %v898, %v900
        %v904 = vsel %vm560, %v900, %v902
        %v909 = vmul.f32 %v875, %v898
        %v910 = vmul.f32 %v876, %v903
        %v911 = vmul.f32 %v877, %v904
        %v912 = vmul.f32 %v878, %v902
        %v913 = vmul.f32 %v879, %v898
        %v914 = vmul.f32 %v880, %v903
        %v915 = vmul.f32 %v881, %v904
        %v916 = vmul.f32 %v882, %v902
        %917 = vst [vmem:[#allocation2] sm:$0xff] 0.0
        %918 = vst [vmem:[#allocation2 + $0x28] sm:$0xff] 0.0
        %919 = vst [vmem:[#allocation2 + $0x20] sm:$0xff] 0.0
        %920 = vst [vmem:[#allocation2 + $0x48] sm:$0xff] 0.0
        %929 = vrot.lane.b32.xlu0 %v909, 19
        %v930 = vpop.permute.xlu0 %929
        %931 = vrot.lane.b32.xlu0 %v910, 19
        %v932 = vpop.permute.xlu0 %931
        %933 = vrot.lane.b32.xlu0 %v911, 19
        %v934 = vpop.permute.xlu0 %933
        %935 = vrot.lane.b32.xlu0 %v912, 19
        %v936 = vpop.permute.xlu0 %935
        %937 = vrot.lane.b32.xlu0 %v913, 19
        %v938 = vpop.permute.xlu0 %937
        %939 = vrot.lane.b32.xlu0 %v914, 19
        %v940 = vpop.permute.xlu0 %939
        %941 = vrot.lane.b32.xlu0 %v915, 19
        %v942 = vpop.permute.xlu0 %941
        %943 = vrot.lane.b32.xlu0 %v916, 19
        %v944 = vpop.permute.xlu0 %943
        %vm945 = vcmask 154624
        %v946 = vsel %vm945, %v930, %v932
        %v947 = vsel %vm945, %v932, %v934
        %v948 = vsel %vm945, %v934, %v936
        %v949 = vsel %vm945, %v938, %v940
        %v950 = vsel %vm945, %v940, %v942
        %v951 = vsel %vm945, %v942, %v944
        %958 = vst [vmem:[#allocation2 + $0x8] sm:$0xff] %v946
        %959 = vst [vmem:[#allocation2 + $0x10] sm:$0xff] %v947
        %960 = vst [vmem:[#allocation2 + $0x18] sm:$0xff] %v948
        %961 = vst [vmem:[#allocation2 + $0x30] sm:$0xff] %v949
        %962 = vst [vmem:[#allocation2 + $0x38] sm:$0xff] %v950
        %963 = vst [vmem:[#allocation2 + $0x40] sm:$0xff] %v951
        %v964 = vld [vmem:[#allocation2] sm:$0xff]
        %v965 = vld [vmem:[#allocation2 + $0x8] sm:$0xff]
        %v966 = vld [vmem:[#allocation2 + $0x10] sm:$0xff]
        %v967 = vld [vmem:[#allocation2 + $0x18] sm:$0xff]
        %v968 = vld [vmem:[#allocation2 + $0x28] sm:$0xff]
        %v969 = vld [vmem:[#allocation2 + $0x30] sm:$0xff]
        %v970 = vld [vmem:[#allocation2 + $0x38] sm:$0xff]
        %v971 = vld [vmem:[#allocation2 + $0x40] sm:$0xff]
        %973 = vset.pattern.permute.xlu0 0
        %974 = vperm.xlu0 %973, %v272
        %v975 = vpop.permute.xlu0 %974
        %978 = vset.pattern.permute.xlu0 0
        %979 = vperm.xlu0 %978, %v273
        %v980 = vpop.permute.xlu0 %979
        %v982 = vmul.f32 %v975, %v964
        %v983 = vmul.f32 %v975, %v965
        %v984 = vmul.f32 %v975, %v966
        %v985 = vmul.f32 %v975, %v967
        %v986 = vmul.f32 %v980, %v968
        %v987 = vmul.f32 %v980, %v969
        %v988 = vmul.f32 %v980, %v970
        %v989 = vmul.f32 %v980, %v971
        %v990 = vadd.f32 %v982, 0.0
        %v991 = vadd.f32 %v983, 0.0
        %v992 = vadd.f32 %v984, 0.0
        %v993 = vadd.f32 %v985, 0.0
        %v994 = vadd.f32 %v986, 0.0
        %v995 = vadd.f32 %v987, 0.0
        %v996 = vadd.f32 %v988, 0.0
        %v997 = vadd.f32 %v989, 0.0
        %998 = vset.pattern.permute.xlu0 1
        %999 = vperm.xlu0 %998, %v272
        %v1000 = vpop.permute.xlu0 %999
        %1002 = vset.pattern.permute.xlu0 1
        %1003 = vperm.xlu0 %1002, %v273
        %v1004 = vpop.permute.xlu0 %1003
        %v1006 = vmul.f32 %v1000, %v964
        %v1007 = vmul.f32 %v1000, %v965
        %v1008 = vmul.f32 %v1000, %v966
        %v1009 = vmul.f32 %v1000, %v967
        %v1010 = vmul.f32 %v1004, %v968
        %v1011 = vmul.f32 %v1004, %v969
        %v1012 = vmul.f32 %v1004, %v970
        %v1013 = vmul.f32 %v1004, %v971
        %1022 = vrot.lane.b32.xlu0 %v1006, 127
        %v1023 = vpop.permute.xlu0 %1022
        %1024 = vrot.lane.b32.xlu0 %v1007, 127
        %v1025 = vpop.permute.xlu0 %1024
        %1026 = vrot.lane.b32.xlu0 %v1008, 127
        %v1027 = vpop.permute.xlu0 %1026
        %1028 = vrot.lane.b32.xlu0 %v1009, 127
        %v1029 = vpop.permute.xlu0 %1028
        %1030 = vrot.lane.b32.xlu0 %v1010, 127
        %v1031 = vpop.permute.xlu0 %1030
        %1032 = vrot.lane.b32.xlu0 %v1011, 127
        %v1033 = vpop.permute.xlu0 %1032
        %1034 = vrot.lane.b32.xlu0 %v1012, 127
        %v1035 = vpop.permute.xlu0 %1034
        %1036 = vrot.lane.b32.xlu0 %v1013, 127
        %v1037 = vpop.permute.xlu0 %1036
        %v1038 = vsel %vm362, %v1023, %v1025
        %v1039 = vsel %vm362, %v1025, %v1027
        %v1040 = vsel %vm362, %v1027, %v1029
        %v1041 = vsel %vm362, %v1031, %v1033
        %v1042 = vsel %vm362, %v1033, %v1035
        %v1043 = vsel %vm362, %v1035, %v1037
        %v1052 = vadd.f32 %v990, %v1038
        %v1053 = vadd.f32 %v991, %v1039
        %v1054 = vadd.f32 %v992, %v1040
        %v1055 = vadd.f32 %v993, %v1029
        %v1056 = vadd.f32 %v994, %v1041
        %v1057 = vadd.f32 %v995, %v1042
        %v1058 = vadd.f32 %v996, %v1043
        %v1059 = vadd.f32 %v997, %v1037
        %1060 = vset.pattern.permute.xlu0 2
        %1061 = vperm.xlu0 %1060, %v272
        %v1062 = vpop.permute.xlu0 %1061
        %1064 = vset.pattern.permute.xlu0 2
        %1065 = vperm.xlu0 %1064, %v273
        %v1066 = vpop.permute.xlu0 %1065
        %v1068 = vmul.f32 %v1062, %v964
        %v1069 = vmul.f32 %v1062, %v965
        %v1070 = vmul.f32 %v1062, %v966
        %v1071 = vmul.f32 %v1062, %v967
        %v1072 = vmul.f32 %v1066, %v968
        %v1073 = vmul.f32 %v1066, %v969
        %v1074 = vmul.f32 %v1066, %v970
        %v1075 = vmul.f32 %v1066, %v971
        %1084 = vrot.lane.b32.xlu0 %v1068, 126
        %v1085 = vpop.permute.xlu0 %1084
        %1086 = vrot.lane.b32.xlu0 %v1069, 126
        %v1087 = vpop.permute.xlu0 %1086
        %1088 = vrot.lane.b32.xlu0 %v1070, 126
        %v1089 = vpop.permute.xlu0 %1088
        %1090 = vrot.lane.b32.xlu0 %v1071, 126
        %v1091 = vpop.permute.xlu0 %1090
        %1092 = vrot.lane.b32.xlu0 %v1072, 126
        %v1093 = vpop.permute.xlu0 %1092
        %1094 = vrot.lane.b32.xlu0 %v1073, 126
        %v1095 = vpop.permute.xlu0 %1094
        %1096 = vrot.lane.b32.xlu0 %v1074, 126
        %v1097 = vpop.permute.xlu0 %1096
        %1098 = vrot.lane.b32.xlu0 %v1075, 126
        %v1099 = vpop.permute.xlu0 %1098
        %v1100 = vsel %vm425, %v1085, %v1087
        %v1101 = vsel %vm425, %v1087, %v1089
        %v1102 = vsel %vm425, %v1089, %v1091
        %v1103 = vsel %vm425, %v1093, %v1095
        %v1104 = vsel %vm425, %v1095, %v1097
        %v1105 = vsel %vm425, %v1097, %v1099
        %v1114 = vadd.f32 %v1052, %v1100
        %v1115 = vadd.f32 %v1053, %v1101
        %v1116 = vadd.f32 %v1054, %v1102
        %v1117 = vadd.f32 %v1055, %v1091
        %v1118 = vadd.f32 %v1056, %v1103
        %v1119 = vadd.f32 %v1057, %v1104
        %v1120 = vadd.f32 %v1058, %v1105
        %v1121 = vadd.f32 %v1059, %v1099
        %1122 = vset.pattern.permute.xlu0 3
        %1123 = vperm.xlu0 %1122, %v272
        %v1124 = vpop.permute.xlu0 %1123
        %1126 = vset.pattern.permute.xlu0 3
        %1127 = vperm.xlu0 %1126, %v273
        %v1128 = vpop.permute.xlu0 %1127
        %v1130 = vmul.f32 %v1124, %v964
        %v1131 = vmul.f32 %v1124, %v965
        %v1132 = vmul.f32 %v1124, %v966
        %v1133 = vmul.f32 %v1124, %v967
        %v1134 = vmul.f32 %v1128, %v968
        %v1135 = vmul.f32 %v1128, %v969
        %v1136 = vmul.f32 %v1128, %v970
        %v1137 = vmul.f32 %v1128, %v971
        %1146 = vrot.lane.b32.xlu0 %v1130, 110
        %v1147 = vpop.permute.xlu0 %1146
        %1148 = vrot.lane.b32.xlu0 %v1131, 110
        %v1149 = vpop.permute.xlu0 %1148
        %1150 = vrot.lane.b32.xlu0 %v1132, 110
        %v1151 = vpop.permute.xlu0 %1150
        %1152 = vrot.lane.b32.xlu0 %v1133, 110
        %v1153 = vpop.permute.xlu0 %1152
        %1154 = vrot.lane.b32.xlu0 %v1134, 110
        %v1155 = vpop.permute.xlu0 %1154
        %1156 = vrot.lane.b32.xlu0 %v1135, 110
        %v1157 = vpop.permute.xlu0 %1156
        %1158 = vrot.lane.b32.xlu0 %v1136, 110
        %v1159 = vpop.permute.xlu0 %1158
        %1160 = vrot.lane.b32.xlu0 %v1137, 110
        %v1161 = vpop.permute.xlu0 %1160
        %v1162 = vsel %vm488, %v1147, %v1149
        %v1163 = vsel %vm488, %v1149, %v1151
        %v1164 = vsel %vm488, %v1151, %v1153
        %v1165 = vsel %vm488, %v1155, %v1157
        %v1166 = vsel %vm488, %v1157, %v1159
        %v1167 = vsel %vm488, %v1159, %v1161
        %v1176 = vadd.f32 %v1114, %v1162
        %v1177 = vadd.f32 %v1115, %v1163
        %v1178 = vadd.f32 %v1116, %v1164
        %v1179 = vadd.f32 %v1117, %v1153
        %v1180 = vadd.f32 %v1118, %v1165
        %v1181 = vadd.f32 %v1119, %v1166
        %v1182 = vadd.f32 %v1120, %v1167
        %v1183 = vadd.f32 %v1121, %v1161
        %1184 = vset.pattern.permute.xlu0 4
        %1185 = vperm.xlu0 %1184, %v272
        %v1186 = vpop.permute.xlu0 %1185
        %1188 = vset.pattern.permute.xlu0 4
        %1189 = vperm.xlu0 %1188, %v273
        %v1190 = vpop.permute.xlu0 %1189
        %v1192 = vmul.f32 %v1186, %v965
        %v1193 = vmul.f32 %v1186, %v966
        %v1194 = vmul.f32 %v1186, %v967
        %v1195 = vmul.f32 %v1190, %v969
        %v1196 = vmul.f32 %v1190, %v970
        %v1197 = vmul.f32 %v1190, %v971
        %1204 = vrot.lane.b32.xlu0 %v1192, 109
        %v1205 = vpop.permute.xlu0 %1204
        %1206 = vrot.lane.b32.xlu0 %v1193, 109
        %v1207 = vpop.permute.xlu0 %1206
        %1208 = vrot.lane.b32.xlu0 %v1194, 109
        %v1209 = vpop.permute.xlu0 %1208
        %1210 = vrot.lane.b32.xlu0 %v1195, 109
        %v1211 = vpop.permute.xlu0 %1210
        %1212 = vrot.lane.b32.xlu0 %v1196, 109
        %v1213 = vpop.permute.xlu0 %1212
        %1214 = vrot.lane.b32.xlu0 %v1197, 109
        %v1215 = vpop.permute.xlu0 %1214
        %v1216 = vsel %vm560, %v1205, %v1207
        %v1217 = vsel %vm560, %v1207, %v1209
        %v1218 = vsel %vm560, %v1211, %v1213
        %v1219 = vsel %vm560, %v1213, %v1215
        %v1228 = vadd.f32 %v1176, %v1205
        %v1229 = vadd.f32 %v1177, %v1216
        %v1230 = vadd.f32 %v1178, %v1217
        %v1231 = vadd.f32 %v1179, %v1209
        %v1232 = vadd.f32 %v1180, %v1211
        %v1233 = vadd.f32 %v1181, %v1218
        %v1234 = vadd.f32 %v1182, %v1219
        %v1235 = vadd.f32 %v1183, %v1215
        %v1236 = vld [vmem:[#allocation2 + $0x8] sm:$0xff]
        %v1237 = vld [vmem:[#allocation2 + $0x10] sm:$0xff]
        %v1238 = vld [vmem:[#allocation2 + $0x18] sm:$0xff]
        %v1239 = vld [vmem:[#allocation2 + $0x20] sm:$0xff]
        %v1240 = vld [vmem:[#allocation2 + $0x30] sm:$0xff]
        %v1241 = vld [vmem:[#allocation2 + $0x38] sm:$0xff]
        %v1242 = vld [vmem:[#allocation2 + $0x40] sm:$0xff]
        %v1243 = vld [vmem:[#allocation2 + $0x48] sm:$0xff]
        %1244 = vset.pattern.permute.xlu0 5
        %1245 = vperm.xlu0 %1244, %v272
        %v1246 = vpop.permute.xlu0 %1245
        %1248 = vset.pattern.permute.xlu0 5
        %1249 = vperm.xlu0 %1248, %v273
        %v1250 = vpop.permute.xlu0 %1249
        %v1252 = vmul.f32 %v1246, %v1236
        %v1253 = vmul.f32 %v1246, %v1237
        %v1254 = vmul.f32 %v1246, %v1238
        %v1255 = vmul.f32 %v1246, %v1239
        %v1256 = vmul.f32 %v1250, %v1240
        %v1257 = vmul.f32 %v1250, %v1241
        %v1258 = vmul.f32 %v1250, %v1242
        %v1259 = vmul.f32 %v1250, %v1243
        %1268 = vrot.lane.b32.xlu0 %v1252, 108
        %v1269 = vpop.permute.xlu0 %1268
        %1270 = vrot.lane.b32.xlu0 %v1253, 108
        %v1271 = vpop.permute.xlu0 %1270
        %1272 = vrot.lane.b32.xlu0 %v1254, 108
        %v1273 = vpop.permute.xlu0 %1272
        %1274 = vrot.lane.b32.xlu0 %v1255, 108
        %v1275 = vpop.permute.xlu0 %1274
        %1276 = vrot.lane.b32.xlu0 %v1256, 108
        %v1277 = vpop.permute.xlu0 %1276
        %1278 = vrot.lane.b32.xlu0 %v1257, 108
        %v1279 = vpop.permute.xlu0 %1278
        %1280 = vrot.lane.b32.xlu0 %v1258, 108
        %v1281 = vpop.permute.xlu0 %1280
        %1282 = vrot.lane.b32.xlu0 %v1259, 108
        %v1283 = vpop.permute.xlu0 %1282
        %v1284 = vsel %vm643, %v1269, %v1271
        %v1285 = vsel %vm643, %v1271, %v1273
        %v1286 = vsel %vm643, %v1273, %v1275
        %v1287 = vsel %vm643, %v1277, %v1279
        %v1288 = vsel %vm643, %v1279, %v1281
        %v1289 = vsel %vm643, %v1281, %v1283
        %v1298 = vadd.f32 %v1228, %v1269
        %v1299 = vadd.f32 %v1229, %v1284
        %v1300 = vadd.f32 %v1230, %v1285
        %v1301 = vadd.f32 %v1231, %v1286
        %v1302 = vadd.f32 %v1232, %v1277
        %v1303 = vadd.f32 %v1233, %v1287
        %v1304 = vadd.f32 %v1234, %v1288
        %v1305 = vadd.f32 %v1235, %v1289
        %1306 = vset.pattern.permute.xlu0 6
        %1307 = vperm.xlu0 %1306, %v272
        %v1308 = vpop.permute.xlu0 %1307
        %1310 = vset.pattern.permute.xlu0 6
        %1311 = vperm.xlu0 %1310, %v273
        %v1312 = vpop.permute.xlu0 %1311
        %v1314 = vmul.f32 %v1308, %v1236
        %v1315 = vmul.f32 %v1308, %v1237
        %v1316 = vmul.f32 %v1308, %v1238
        %v1317 = vmul.f32 %v1308, %v1239
        %v1318 = vmul.f32 %v1312, %v1240
        %v1319 = vmul.f32 %v1312, %v1241
        %v1320 = vmul.f32 %v1312, %v1242
        %v1321 = vmul.f32 %v1312, %v1243
        %1330 = vrot.lane.b32.xlu0 %v1314, 92
        %v1331 = vpop.permute.xlu0 %1330
        %1332 = vrot.lane.b32.xlu0 %v1315, 92
        %v1333 = vpop.permute.xlu0 %1332
        %1334 = vrot.lane.b32.xlu0 %v1316, 92
        %v1335 = vpop.permute.xlu0 %1334
        %1336 = vrot.lane.b32.xlu0 %v1317, 92
        %v1337 = vpop.permute.xlu0 %1336
        %1338 = vrot.lane.b32.xlu0 %v1318, 92
        %v1339 = vpop.permute.xlu0 %1338
        %1340 = vrot.lane.b32.xlu0 %v1319, 92
        %v1341 = vpop.permute.xlu0 %1340
        %1342 = vrot.lane.b32.xlu0 %v1320, 92
        %v1343 = vpop.permute.xlu0 %1342
        %1344 = vrot.lane.b32.xlu0 %v1321, 92
        %v1345 = vpop.permute.xlu0 %1344
        %v1346 = vsel %vm706, %v1331, %v1333
        %v1347 = vsel %vm706, %v1333, %v1335
        %v1348 = vsel %vm706, %v1335, %v1337
        %v1349 = vsel %vm706, %v1339, %v1341
        %v1350 = vsel %vm706, %v1341, %v1343
        %v1351 = vsel %vm706, %v1343, %v1345
        %v1360 = vadd.f32 %v1298, %v1331
        %v1361 = vadd.f32 %v1299, %v1346
        %v1362 = vadd.f32 %v1300, %v1347
        %v1363 = vadd.f32 %v1301, %v1348
        %v1364 = vadd.f32 %v1302, %v1339
        %v1365 = vadd.f32 %v1303, %v1349
        %v1366 = vadd.f32 %v1304, %v1350
        %v1367 = vadd.f32 %v1305, %v1351
        %1368 = vset.pattern.permute.xlu0 7
        %1369 = vperm.xlu0 %1368, %v272
        %v1370 = vpop.permute.xlu0 %1369
        %1372 = vset.pattern.permute.xlu0 7
        %1373 = vperm.xlu0 %1372, %v273
        %v1374 = vpop.permute.xlu0 %1373
        %v1376 = vmul.f32 %v1370, %v1236
        %v1377 = vmul.f32 %v1370, %v1237
        %v1378 = vmul.f32 %v1370, %v1238
        %v1379 = vmul.f32 %v1370, %v1239
        %v1380 = vmul.f32 %v1374, %v1240
        %v1381 = vmul.f32 %v1374, %v1241
        %v1382 = vmul.f32 %v1374, %v1242
        %v1383 = vmul.f32 %v1374, %v1243
        %1392 = vrot.lane.b32.xlu0 %v1376, 91
        %v1393 = vpop.permute.xlu0 %1392
        %1394 = vrot.lane.b32.xlu0 %v1377, 91
        %v1395 = vpop.permute.xlu0 %1394
        %1396 = vrot.lane.b32.xlu0 %v1378, 91
        %v1397 = vpop.permute.xlu0 %1396
        %1398 = vrot.lane.b32.xlu0 %v1379, 91
        %v1399 = vpop.permute.xlu0 %1398
        %1400 = vrot.lane.b32.xlu0 %v1380, 91
        %v1401 = vpop.permute.xlu0 %1400
        %1402 = vrot.lane.b32.xlu0 %v1381, 91
        %v1403 = vpop.permute.xlu0 %1402
        %1404 = vrot.lane.b32.xlu0 %v1382, 91
        %v1405 = vpop.permute.xlu0 %1404
        %1406 = vrot.lane.b32.xlu0 %v1383, 91
        %v1407 = vpop.permute.xlu0 %1406
        %v1408 = vsel %vm769, %v1393, %v1395
        %v1409 = vsel %vm769, %v1395, %v1397
        %v1410 = vsel %vm769, %v1397, %v1399
        %v1411 = vsel %vm769, %v1401, %v1403
        %v1412 = vsel %vm769, %v1403, %v1405
        %v1413 = vsel %vm769, %v1405, %v1407
        %v1422 = vadd.f32 %v1360, %v1393
        %v1423 = vadd.f32 %v1361, %v1408
        %v1424 = vadd.f32 %v1362, %v1409
        %v1425 = vadd.f32 %v1363, %v1410
        %v1426 = vadd.f32 %v1364, %v1401
        %v1427 = vadd.f32 %v1365, %v1411
        %v1428 = vadd.f32 %v1366, %v1412
        %v1429 = vadd.f32 %v1367, %v1413
        %1430 = vset.pattern.permute.xlu0 8
        %1431 = vperm.xlu0 %1430, %v272
        %v1432 = vpop.permute.xlu0 %1431
        %1434 = vset.pattern.permute.xlu0 8
        %1435 = vperm.xlu0 %1434, %v273
        %v1436 = vpop.permute.xlu0 %1435
        %v1438 = vmul.f32 %v1432, %v1236
        %v1439 = vmul.f32 %v1432, %v1237
        %v1440 = vmul.f32 %v1432, %v1238
        %v1441 = vmul.f32 %v1432, %v1239
        %v1442 = vmul.f32 %v1436, %v1240
        %v1443 = vmul.f32 %v1436, %v1241
        %v1444 = vmul.f32 %v1436, %v1242
        %v1445 = vmul.f32 %v1436, %v1243
        %1454 = vrot.lane.b32.xlu0 %v1438, 90
        %v1455 = vpop.permute.xlu0 %1454
        %1456 = vrot.lane.b32.xlu0 %v1439, 90
        %v1457 = vpop.permute.xlu0 %1456
        %1458 = vrot.lane.b32.xlu0 %v1440, 90
        %v1459 = vpop.permute.xlu0 %1458
        %1460 = vrot.lane.b32.xlu0 %v1441, 90
        %v1461 = vpop.permute.xlu0 %1460
        %1462 = vrot.lane.b32.xlu0 %v1442, 90
        %v1463 = vpop.permute.xlu0 %1462
        %1464 = vrot.lane.b32.xlu0 %v1443, 90
        %v1465 = vpop.permute.xlu0 %1464
        %1466 = vrot.lane.b32.xlu0 %v1444, 90
        %v1467 = vpop.permute.xlu0 %1466
        %1468 = vrot.lane.b32.xlu0 %v1445, 90
        %v1469 = vpop.permute.xlu0 %1468
        %v1470 = vsel %vm832, %v1455, %v1457
        %v1471 = vsel %vm832, %v1457, %v1459
        %v1472 = vsel %vm832, %v1459, %v1461
        %v1473 = vsel %vm832, %v1463, %v1465
        %v1474 = vsel %vm832, %v1465, %v1467
        %v1475 = vsel %vm832, %v1467, %v1469
        %v1484 = vadd.f32 %v1422, %v1455
        %v1485 = vadd.f32 %v1423, %v1470
        %v1486 = vadd.f32 %v1424, %v1471
        %v1487 = vadd.f32 %v1425, %v1472
        %v1488 = vadd.f32 %v1426, %v1463
        %v1489 = vadd.f32 %v1427, %v1473
        %v1490 = vadd.f32 %v1428, %v1474
        %v1491 = vadd.f32 %v1429, %v1475
        %vm1492 = vcmask 1048424
        %v1493 = vsel %vm1492, %v1484, 0.0
        %v1494 = vsel %vm1492, %v1488, 0.0
        %v1495 = vadd.f32 %v1493, %v1494
        %v1496 = vrot.slane %v1495, 4
        %v1497 = vadd.f32 %v1495, %v1496
        %v1498 = vrot.slane %v1497, 2
        %v1499 = vadd.f32 %v1497, %v1498
        %v1500 = vrot.slane %v1499, 1
        %v1501 = vadd.f32 %v1499, %v1500
        %v1502 = vadd.f32 %v1485, %v1489
        %v1503 = vrot.slane %v1502, 4
        %v1504 = vadd.f32 %v1502, %v1503
        %v1505 = vrot.slane %v1504, 2
        %v1506 = vadd.f32 %v1504, %v1505
        %v1507 = vrot.slane %v1506, 1
        %v1508 = vadd.f32 %v1506, %v1507
        %v1509 = vadd.f32 %v1486, %v1490
        %v1510 = vrot.slane %v1509, 4
        %v1511 = vadd.f32 %v1509, %v1510
        %v1512 = vrot.slane %v1511, 2
        %v1513 = vadd.f32 %v1511, %v1512
        %v1514 = vrot.slane %v1513, 1
        %v1515 = vadd.f32 %v1513, %v1514
        %v1516 = vsel %vm560, %v1487, 0.0
        %v1517 = vsel %vm560, %v1491, 0.0
        %v1518 = vadd.f32 %v1516, %v1517
        %v1519 = vrot.slane %v1518, 4
        %v1520 = vadd.f32 %v1518, %v1519
        %v1521 = vrot.slane %v1520, 2
        %v1522 = vadd.f32 %v1520, %v1521
        %v1523 = vrot.slane %v1522, 1
        %v1524 = vadd.f32 %v1522, %v1523
        %v1525 = vld [vmem:[#allocation3] sm:$0x1]
        %1527 = vset.pattern.permute.xlu0 0
        %1528 = vperm.xlu0 %1527, %v1525
        %v1529 = vpop.permute.xlu0 %1528
        %v1531 = vlaneseq
        %v1532 = vshrl.u32 %v1531, 7
        %v1533 = vsub.s32 0, %v1532
        %v1534 = vrot.slane %v1529, %v1533
        %v1535 = vadd.f32 %v1501, %v1534
        %v1536 = vadd.f32 %v1508, %v1534
        %v1537 = vadd.f32 %v1515, %v1534
        %v1538 = vadd.f32 %v1524, %v1534
        %v1543 = vcombine.low %v1535, %v1536
        %v1544 = vcombine.low %v1537, %v1538
        %v1546 = vunpack.c.l.s4 1966171168
        %v1547 = vunpack.c.0.s8 %v1546
        %v1548 = vlaneseq
        %v1549 = vshrl.u32 %v1548, 7
        %v1550 = vsub.s32 %v1547, %v1549
        %v1551 = vrot.slane %v1543, %v1550
        %v1553 = vunpack.c.l.s4 1966171168
        %v1554 = vunpack.c.0.s8 %v1553
        %v1555 = vlaneseq
        %v1556 = vshrl.u32 %v1555, 7
        %v1557 = vsub.s32 %v1554, %v1556
        %v1558 = vrot.slane %v1544, %v1557
        %v1559 = vcombine.low %v1551, %v1558
        %v1561 = vunpack.c.l.s4 1966171168
        %v1562 = vunpack.c.0.s8 %v1561
        %v1563 = vlaneseq
        %v1564 = vshrl.u32 %v1563, 7
        %v1565 = vsub.s32 %v1562, %v1564
        %v1566 = vrot.slane %v1559, %v1565
        %1567 = vrot.lane.b32.xlu0 %v1566, 19
        %v1568 = vpop.permute.xlu0 %1567
        %v1569 = vrot.slane %v1568, 1
        %v1570 = vsel %vm945, %v1568, %v1569
        %v1572 = vlaneseq
        %vm1573 = vcmp.ge.s32.totalorder %v1572, 0
        %vm1574 = vcmp.lt.s32.totalorder %v1572, 384
        %vm1575 = vmand %vm1573, %vm1574
        %1576 = vst.msk [vmem:[%s269] sm:$0x7] %vm1575, %v1570
        %s1577 = sand.u32 %s164, 1
        %s1578 = scalar_lea.sflag [#allocation6], %s1577
        %s1579 = sand.u32 %s164, 1
        %s1580 = smul.addr %s1579, 3
        %s1581 = scalar_lea.vmem [#allocation7], %s1580
        // Predicated region
        $region49: #{tpu_custom_call.1} parent=43 // pred_check
          %p1582 = pneg %p174
        $region50: #{tpu_custom_call.1} parent=43 // pred_check_branch
          %1584 = sbr.rel (%p1582) target = $region52
        $region51: #{tpu_custom_call.1} parent=43 // pred_region
          %s1586 = ssub.s32 48, 48
          %1587 = vsyncadd %s1578, %s1586
          %s1588 = smul.addr %s25, 3
          %s1589 = smul.addr %s1588, 16
          %s1590 = scalar_lea.hbm %s6, %s1589
          %s1592 = sshll.u32 %s1581, 4
          %s1593 = int_to_ptr.vmem [resolvable:$true] %s1592
          %1595 = dma.vmem_to_hbm [thread:$0]  %s1593, 48, %s1590, %s1578
        $region52: #{tpu_custom_call.1} parent=43 // pred_fallthru
          _
      $region44: #{tpu_custom_call.1} parent=5 // pred_fallthru
        _
      %p1596 = scmp.le.s32.totalorder 2, %s20
      // Predicated region
      $region53: #{tpu_custom_call.1} parent=5 // pred_check
        %p1597 = pneg %p1596
      $region54: #{tpu_custom_call.1} parent=5 // pred_check_branch
        %1599 = sbr.rel (%p1597) target = $region56
      $region55: #{tpu_custom_call.1} parent=5 // pred_region
        %s1600 = ssub.s32 %s20, 2
        // Predicated region
        $region57: #{tpu_custom_call.1} parent=55 // pred_check
          %p1601 = pneg %p180
        $region58: #{tpu_custom_call.1} parent=55 // pred_check_branch
          %1603 = sbr.rel (%p1601) target = $region60
        $region59: #{tpu_custom_call.1} parent=55 // pred_region
          %s1604 = sand.u32 %s165, 1
          %s1605 = scalar_lea.sflag [#allocation6], %s1604
          %s1606 = sand.u32 %s165, 1
          %s1607 = smul.addr %s1606, 3
          %s1608 = scalar_lea.vmem [#allocation7], %s1607
          %1609 = dma.done %s1605, 48
        $region60: #{tpu_custom_call.1} parent=55 // pred_fallthru
          _
      $region56: #{tpu_custom_call.1} parent=5 // pred_fallthru
        _
    $region6: #{tpu_custom_call.1} parent=1 // loop_footer
      %s24 = sadd.s32 1, %s20
    $region7: #{tpu_custom_call.1} parent=1 // loop_footer_branch
      %19 = sbr.rel target = $region3
    $region8: #{tpu_custom_call.1} parent=1 // loop_exit
      _
    %1610 = vsyncpa [#allocation5], 1
    %s1611 = scalar_lea.sflag [#allocation5], 1
    %1612 = vsyncpa %s1611, 1
    %1613 = vsyncpa [#allocation6], 1
    %s1614 = scalar_lea.sflag [#allocation6], 1
    %1615 = vsyncpa %s1614, 1

</llo_original>
